<compile_context>
chip_gen: v7x
topology: tpu7x:2x2x1
jax: 0.10.0
libtpu: 0.0.40
codegen_flags: <defaults>
</compile_context>

<pallas_src>
import functools

import jax
import jax.numpy as jnp
from jax import lax
from jax.experimental import pallas as pl
from jax.experimental.pallas import tpu as pltpu


# ---------------------------------------------------------------------------
# Fused kernel
# ---------------------------------------------------------------------------
def _double_deconv_kernel(cols1_ref, w1_ref, b1_ref, w2_ref, b2_ref,
                          out_ref, y1p_ref, *,
                          N, H1, W1, C, Qh, Qw, Tmax,
                          pbh, pbw, phase_offsets):
    """Fused DoubleDeconv forward.

    cols1_ref: (M1, K*K*Cin)            im2col of conv1 input, M1 = N*H1*W1
    w1_ref   : (K*K*Cin, C)             flipped conv1 weights (one slab)
    b1_ref   : (1, C)
    w2_ref   : (s*s, Tmax*Tmax*C, C)    per-output-phase conv2 weight slabs
    b2_ref   : (1, C)
    out_ref  : (s*s, N, Qh, Qw, C)      conv2 output, phase-major
    y1p_ref  : (N, H1p, W1p, C)         VMEM scratch: padded conv1 output
    """
    # ---- conv1: single im2col matmul + bias + leaky_relu -----------------
    y1 = jnp.dot(cols1_ref[...], w1_ref[...],
                 preferred_element_type=jnp.float32)
    y1 = y1 + b1_ref[...]                               # bias read once
    y1 = jnp.where(y1 > 0, y1, 0.01 * y1)               # F.leaky_relu (0.01)

    # ---- stash conv1 output into a zero-padded VMEM scratch ---------------
    y1p_ref[...] = jnp.zeros_like(y1p_ref)
    y1p_ref[:, pbh:pbh + H1, pbw:pbw + W1, :] = y1.reshape(N, H1, W1, C)

    # ---- conv2: one im2col matmul per output phase (no dilated buffer) ----
    b2 = b2_ref[...]                                    # hoisted
    for idx, (oh0, ow0) in enumerate(phase_offsets):
        taps = []
        for th in range(Tmax):
            for tw in range(Tmax):
                taps.append(y1p_ref[:,
                                    oh0 + th:oh0 + th + Qh,
                                    ow0 + tw:ow0 + tw + Qw, :])
        cols2 = jnp.concatenate(taps, axis=-1).reshape(N * Qh * Qw,
                                                       Tmax * Tmax * C)
        y2 = jnp.dot(cols2, w2_ref[idx],
                     preferred_element_type=jnp.float32) + b2
        out_ref[idx] = y2.reshape(N, Qh, Qw, C)


# ---------------------------------------------------------------------------
# Static metadata for the phase (sub-pixel) decomposition of conv2
# ---------------------------------------------------------------------------
def _phase_meta(K, s, p, H1, W1, Ho, Wo):
    pl2 = K - 1 - p
    Tmax = -(-K // s)                       # ceil(K / s)  taps per phase/axis
    Qh = -(-Ho // s)                        # output rows per phase (max)
    Qw = -(-Wo // s)
    e_h = [(rh + ((pl2 - rh) % s) - pl2) // s for rh in range(s)]
    e_w = [(rw + ((pl2 - rw) % s) - pl2) // s for rw in range(s)]
    pbh = max(0, -min(e_h))
    pbw = max(0, -min(e_w))
    pah = max(0, max(e_h) + Tmax - 1 + Qh - H1)
    paw = max(0, max(e_w) + Tmax - 1 + Qw - W1)
    H1p = pbh + H1 + pah
    W1p = pbw + W1 + paw
    phase_offsets = tuple((e_h[rh] + pbh, e_w[rw] + pbw)
                          for rh in range(s) for rw in range(s))
    return Tmax, Qh, Qw, H1p, W1p, pbh, pbw, phase_offsets


def _conv2_phase_slabs(w2_torch, K, s, p, Tmax):
    """Per-phase (Tmax*Tmax*Cin2, Cout) weight slabs (invalid taps -> zeros)."""
    Cin2, Cout = w2_torch.shape[0], w2_torch.shape[1]
    pl2 = K - 1 - p
    w2f = jnp.transpose(jnp.flip(w2_torch, axis=(2, 3)),
                        (2, 3, 0, 1)).astype(jnp.float32)   # (K,K,Cin2,Cout)
    slabs = []
    for rh in range(s):
        a_h = (pl2 - rh) % s
        for rw in range(s):
            a_w = (pl2 - rw) % s
            rows = []
            for th in range(Tmax):
                kh = a_h + s * th
                for tw in range(Tmax):
                    kw = a_w + s * tw
                    if kh < K and kw < K:
                        rows.append(w2f[kh, kw])
                    else:
                        rows.append(jnp.zeros((Cin2, Cout), jnp.float32))
            slabs.append(jnp.concatenate(rows, axis=0))
    return jnp.stack(slabs, axis=0)          # (s*s, Tmax*Tmax*Cin2, Cout)


def _im2col_stride1(x_nhwc, K, pad):
    """(N,Hi,Wi,Cin) -> (N*H1*W1, K*K*Cin) patches of the padded input."""
    N, Hi, Wi, Cin = x_nhwc.shape
    xp = lax.pad(x_nhwc, jnp.float32(0),
                 ((0, 0, 0), (pad, pad, 0), (pad, pad, 0), (0, 0, 0)))
    Hp, Wp = xp.shape[1], xp.shape[2]
    H1, W1 = Hp - K + 1, Wp - K + 1
    cols = jnp.concatenate(
        [xp[:, kh:kh + H1, kw:kw + W1, :]
         for kh in range(K) for kw in range(K)], axis=-1)
    return cols.reshape(N * H1 * W1, K * K * Cin), H1, W1


# ---------------------------------------------------------------------------
# Public forward (NCHW in / NCHW out, PyTorch semantics)
# ---------------------------------------------------------------------------
@functools.partial(jax.jit,
                   static_argnames=("output_size", "k", "stride", "padding"))
def double_deconv_forward(img_nchw, params, *, output_size, k, stride, padding):
    N = img_nchw.shape[0]
    Cin = img_nchw.shape[1]
    Cout = params["w1"].shape[1]
    x = jnp.transpose(img_nchw, (0, 2, 3, 1)).astype(jnp.float32)   # NHWC

    # --- conv1 (stride 1): im2col in the wrapper -> one matmul in kernel ---
    pl1 = k - 1 - padding
    cols1, H1, W1 = _im2col_stride1(x, k, pl1)
    osize1 = [int(i / 2) for i in output_size]
    assert osize1[-2] == H1 and osize1[-1] == W1, "output_size/2 mismatch"

    # --- conv2: output_padding from requested output_size (PyTorch rule) ---
    s = stride
    min_h = (H1 - 1) * s - 2 * padding + k
    min_w = (W1 - 1) * s - 2 * padding + k
    op_h = int(output_size[-2]) - min_h
    op_w = int(output_size[-1]) - min_w
    assert 0 <= op_h < s and 0 <= op_w < s, "invalid output_size for conv2"
    Ho, Wo = min_h + op_h, min_w + op_w

    Tmax, Qh, Qw, H1p, W1p, pbh, pbw, phase_offsets = _phase_meta(
        k, s, padding, H1, W1, Ho, Wo)

    # weight / bias slabs (tiny wrapper-side XLA)
    w1_mat = jnp.transpose(jnp.flip(params["w1"], axis=(2, 3)),
                           (2, 3, 0, 1)).reshape(k * k * Cin, Cout)
    w1_mat = w1_mat.astype(jnp.float32)
    b1 = params["b1"].reshape(1, Cout).astype(jnp.float32)
    w2_slabs = _conv2_phase_slabs(params["w2"], k, s, padding, Tmax)
    b2 = params["b2"].reshape(1, Cout).astype(jnp.float32)

    M1, C1 = cols1.shape
    kernel = functools.partial(
        _double_deconv_kernel,
        N=N, H1=H1, W1=W1, C=Cout, Qh=Qh, Qw=Qw, Tmax=Tmax,
        pbh=pbh, pbw=pbw, phase_offsets=phase_offsets)

    out_ph = pl.pallas_call(
        kernel,
        out_shape=jax.ShapeDtypeStruct((s * s, N, Qh, Qw, Cout), jnp.float32),
        grid_spec=pltpu.PrefetchScalarGridSpec(
            num_scalar_prefetch=0,
            grid=(1,),
            in_specs=[
                pl.BlockSpec((M1, C1), lambda i: (0, 0)),
                pl.BlockSpec((C1, Cout), lambda i: (0, 0)),
                pl.BlockSpec((1, Cout), lambda i: (0, 0)),
                pl.BlockSpec((s * s, Tmax * Tmax * Cout, Cout),
                             lambda i: (0, 0, 0)),
                pl.BlockSpec((1, Cout), lambda i: (0, 0)),
            ],
            out_specs=pl.BlockSpec((s * s, N, Qh, Qw, Cout),
                                   lambda i: (0, 0, 0, 0, 0)),
            scratch_shapes=[pltpu.VMEM((N, H1p, W1p, Cout), jnp.float32)],
        ),
        compiler_params=pltpu.CompilerParams(
            dimension_semantics=("arbitrary",)),
    )(cols1, w1_mat, b1, w2_slabs, b2)

    # interleave phases -> (N, Ho, Wo, C), then back to NCHW (tiny XLA glue)
    full = out_ph.reshape(s, s, N, Qh, Qw, Cout)
    full = jnp.transpose(full, (2, 3, 0, 4, 1, 5)).reshape(
        N, Qh * s, Qw * s, Cout)
    out = full[:, :Ho, :Wo, :]
    return jnp.transpose(out, (0, 3, 1, 2))


# ---------------------------------------------------------------------------
# Pure-JAX (XLA conv) reference for correctness checking
# ---------------------------------------------------------------------------
def _reference_conv_transpose(x_nhwc, w_torch, bias, *, stride, padding,
                              output_padding, leaky):
    K = w_torch.shape[2]
    p = padding
    op_h, op_w = output_padding
    w_k = jnp.transpose(jnp.flip(w_torch, axis=(2, 3)), (2, 3, 0, 1))  # HWIO
    out = lax.conv_general_dilated(
        x_nhwc.astype(jnp.float32), w_k.astype(jnp.float32),
        window_strides=(1, 1),
        padding=((K - 1 - p, K - 1 - p + op_h), (K - 1 - p, K - 1 - p + op_w)),
        lhs_dilation=(stride, stride),
        dimension_numbers=("NHWC", "HWIO", "NHWC"))
    out = out + bias.reshape(1, 1, 1, -1)
    if leaky:
        out = jnp.where(out > 0, out, 0.01 * out)
    return out


if __name__ == "__main__":
    # Module config: DoubleDeconv(cin=4, cout=8, k=3, stride=2, padding=1)
    cin, cout, k, stride, padding = 4, 8, 3, 2, 1
    N, Hi, Wi = 2, 8, 8
    output_size = (N, cout, 16, 16)

    key = jax.random.PRNGKey(0)
    k1, k2, k3, k4, k5 = jax.random.split(key, 5)
    params = {
        "w1": 0.1 * jax.random.normal(k1, (cin, cout, k, k), jnp.float32),
        "b1": 0.05 * jax.random.normal(k2, (cout,), jnp.float32),
        "w2": 0.1 * jax.random.normal(k3, (cout, cout, k, k), jnp.float32),
        "b2": 0.05 * jax.random.normal(k4, (cout,), jnp.float32),
    }
    img = jax.random.normal(k5, (N, cin, Hi, Wi), jnp.float32)

    out = double_deconv_forward(img, params, output_size=output_size,
                                k=k, stride=stride, padding=padding)
    out = jax.block_until_ready(out)
    assert out.shape == (N, cout, 16, 16), out.shape

    # Correctness check against a pure-JAX (XLA) reference.
    x_nhwc = jnp.transpose(img, (0, 2, 3, 1))
    r = _reference_conv_transpose(x_nhwc, params["w1"], params["b1"],
                                  stride=1, padding=padding,
                                  output_padding=(0, 0), leaky=True)
    r = _reference_conv_transpose(r, params["w2"], params["b2"],
                                  stride=stride, padding=padding,
                                  output_padding=(1, 1), leaky=False)
    ref = jnp.transpose(r, (0, 3, 1, 2))
    assert jnp.allclose(out, ref, atol=1e-4, rtol=1e-4), \
        float(jnp.max(jnp.abs(out - ref)))

    print("KERNEL_OK")
</pallas_src>

<mosaic_0001>
module attributes {stable_mosaic.version = 11 : i64} {
  func.func @_double_deconv_kernel(%arg0: i32, %arg1: memref<128x36xf32, #tpu.memory_space<vmem>>, %arg2: memref<36x8xf32, #tpu.memory_space<vmem>>, %arg3: memref<1x8xf32, #tpu.memory_space<vmem>>, %arg4: memref<4x32x8xf32, #tpu.memory_space<vmem>>, %arg5: memref<1x8xf32, #tpu.memory_space<vmem>>, %arg6: memref<4x2x8x8x8xf32, #tpu.memory_space<vmem>>, %arg7: memref<2x9x9x8xf32, #tpu.memory_space<vmem>>) attributes {dimension_semantics = [#tpu.dimension_semantics<arbitrary>], iteration_bounds = array<i64: 1>, scalar_prefetch = 0 : i64, scratch_operands = 1 : i64, tpu.core_type = #tpu.core_type<tc>, window_params = [{pipeline_mode = #tpu.pipeline_mode<synchronous>, transform_indices = @transform_0, window_bounds = array<i64: 128, 36>}, {pipeline_mode = #tpu.pipeline_mode<synchronous>, transform_indices = @transform_1, window_bounds = array<i64: 36, 8>}, {pipeline_mode = #tpu.pipeline_mode<synchronous>, transform_indices = @transform_2, window_bounds = array<i64: 1, 8>}, {pipeline_mode = #tpu.pipeline_mode<synchronous>, transform_indices = @transform_3, window_bounds = array<i64: 4, 32, 8>}, {pipeline_mode = #tpu.pipeline_mode<synchronous>, transform_indices = @transform_4, window_bounds = array<i64: 1, 8>}, {pipeline_mode = #tpu.pipeline_mode<synchronous>, transform_indices = @transform_5, window_bounds = array<i64: 4, 2, 8, 8, 8>}]} {
    %c0 = arith.constant 0 : index
    %c0_0 = arith.constant 0 : index
    %0 = vector.load %arg1[%c0, %c0_0] : memref<128x36xf32, #tpu.memory_space<vmem>>, vector<128x36xf32>
    %c0_1 = arith.constant 0 : index
    %c0_2 = arith.constant 0 : index
    %1 = vector.load %arg2[%c0_1, %c0_2] : memref<36x8xf32, #tpu.memory_space<vmem>>, vector<36x8xf32>
    %cst = arith.constant dense<0.000000e+00> : vector<128x8xf32>
    %2 = tpu.matmul %0, %1, %cst {dimension_numbers = #tpu.dot_dimension_numbers<[1], [0], [0], [1], [0, 0, 1, 1], [], []>} : vector<128x36xf32>, vector<36x8xf32>, vector<128x8xf32> -> vector<128x8xf32>
    %c0_3 = arith.constant 0 : index
    %c0_4 = arith.constant 0 : index
    %3 = vector.load %arg3[%c0_3, %c0_4] : memref<1x8xf32, #tpu.memory_space<vmem>>, vector<1x8xf32>
    %4 = vector.broadcast %3 : vector<1x8xf32> to vector<128x8xf32>
    %5 = arith.addf %2, %4 : vector<128x8xf32>
    %cst_5 = arith.constant 0.000000e+00 : f32
    %6 = vector.broadcast %cst_5 : f32 to vector<128x8xf32>
    %7 = arith.cmpf ogt, %5, %6 : vector<128x8xf32>
    %cst_6 = arith.constant 0.00999999977 : f32
    %8 = vector.broadcast %cst_6 : f32 to vector<128x8xf32>
    %9 = arith.mulf %8, %5 : vector<128x8xf32>
    %10 = arith.select %7, %5, %9 : vector<128x8xi1>, vector<128x8xf32>
    %cst_7 = arith.constant 0.000000e+00 : f32
    %11 = vector.broadcast %cst_7 : f32 to vector<2x9x9x8xf32>
    %c0_8 = arith.constant 0 : index
    %c0_9 = arith.constant 0 : index
    %c0_10 = arith.constant 0 : index
    %c0_11 = arith.constant 0 : index
    %12 = vector.load %arg7[%c0_8, %c0_9, %c0_10, %c0_11] : memref<2x9x9x8xf32, #tpu.memory_space<vmem>>, vector<2x9x9x8xf32>
    tpu.vector_store %arg7[%c0_8, %c0_9, %c0_10, %c0_11], %11 {strides = array<i32>} : memref<2x9x9x8xf32, #tpu.memory_space<vmem>>, vector<2x9x9x8xf32>,
    %13 = vector.shape_cast %10 : vector<128x8xf32> to vector<2x8x8x8xf32>
    %c0_12 = arith.constant 0 : index
    %c0_13 = arith.constant 0 : index
    %c0_14 = arith.constant 0 : index
    %c0_15 = arith.constant 0 : index
    %14 = vector.load %arg7[%c0_12, %c0_13, %c0_14, %c0_15] : memref<2x9x9x8xf32, #tpu.memory_space<vmem>>, vector<2x8x8x8xf32>
    tpu.vector_store %arg7[%c0_12, %c0_13, %c0_14, %c0_15], %13 {strides = array<i32>} : memref<2x9x9x8xf32, #tpu.memory_space<vmem>>, vector<2x8x8x8xf32>,
    %c0_16 = arith.constant 0 : index
    %c0_17 = arith.constant 0 : index
    %15 = vector.load %arg5[%c0_16, %c0_17] : memref<1x8xf32, #tpu.memory_space<vmem>>, vector<1x8xf32>
    %c0_18 = arith.constant 0 : index
    %c0_19 = arith.constant 0 : index
    %c0_20 = arith.constant 0 : index
    %c0_21 = arith.constant 0 : index
    %16 = vector.load %arg7[%c0_18, %c0_19, %c0_20, %c0_21] : memref<2x9x9x8xf32, #tpu.memory_space<vmem>>, vector<2x8x8x8xf32>
    %c0_22 = arith.constant 0 : index
    %c0_23 = arith.constant 0 : index
    %c1 = arith.constant 1 : index
    %c0_24 = arith.constant 0 : index
    %17 = vector.load %arg7[%c0_22, %c0_23, %c1, %c0_24] : memref<2x9x9x8xf32, #tpu.memory_space<vmem>>, vector<2x8x8x8xf32>
    %c0_25 = arith.constant 0 : index
    %c1_26 = arith.constant 1 : index
    %c0_27 = arith.constant 0 : index
    %c0_28 = arith.constant 0 : index
    %18 = vector.load %arg7[%c0_25, %c1_26, %c0_27, %c0_28] : memref<2x9x9x8xf32, #tpu.memory_space<vmem>>, vector<2x8x8x8xf32>
    %c0_29 = arith.constant 0 : index
    %c1_30 = arith.constant 1 : index
    %c1_31 = arith.constant 1 : index
    %c0_32 = arith.constant 0 : index
    %19 = vector.load %arg7[%c0_29, %c1_30, %c1_31, %c0_32] : memref<2x9x9x8xf32, #tpu.memory_space<vmem>>, vector<2x8x8x8xf32>
    %20 = tpu.concatenate %16, %17, %18, %19 in 3 : vector<2x8x8x8xf32>, vector<2x8x8x8xf32>, vector<2x8x8x8xf32>, vector<2x8x8x8xf32> -> vector<2x8x8x32xf32>
    %21 = vector.shape_cast %20 : vector<2x8x8x32xf32> to vector<128x32xf32>
    %c0_33 = arith.constant 0 : index
    %c0_34 = arith.constant 0 : index
    %c0_35 = arith.constant 0 : index
    %22 = vector.load %arg4[%c0_33, %c0_34, %c0_35] : memref<4x32x8xf32, #tpu.memory_space<vmem>>, vector<1x32x8xf32>
    %23 = vector.shape_cast %22 : vector<1x32x8xf32> to vector<32x8xf32>
    %cst_36 = arith.constant dense<0.000000e+00> : vector<128x8xf32>
    %24 = tpu.matmul %21, %23, %cst_36 {dimension_numbers = #tpu.dot_dimension_numbers<[1], [0], [0], [1], [0, 0, 1, 1], [], []>} : vector<128x32xf32>, vector<32x8xf32>, vector<128x8xf32> -> vector<128x8xf32>
    %25 = vector.broadcast %15 : vector<1x8xf32> to vector<128x8xf32>
    %26 = arith.addf %24, %25 : vector<128x8xf32>
    %27 = vector.shape_cast %26 : vector<128x8xf32> to vector<2x8x8x8xf32>
    %c0_37 = arith.constant 0 : index
    %c0_38 = arith.constant 0 : index
    %c0_39 = arith.constant 0 : index
    %c0_40 = arith.constant 0 : index
    %c0_41 = arith.constant 0 : index
    %28 = vector.load %arg6[%c0_37, %c0_38, %c0_39, %c0_40, %c0_41] : memref<4x2x8x8x8xf32, #tpu.memory_space<vmem>>, vector<1x2x8x8x8xf32>
    %29 = vector.shape_cast %28 : vector<1x2x8x8x8xf32> to vector<2x8x8x8xf32>
    %30 = vector.shape_cast %27 : vector<2x8x8x8xf32> to vector<1x2x8x8x8xf32>
    tpu.vector_store %arg6[%c0_37, %c0_38, %c0_39, %c0_40, %c0_41], %30 {strides = array<i32>} : memref<4x2x8x8x8xf32, #tpu.memory_space<vmem>>, vector<1x2x8x8x8xf32>,
    %c0_42 = arith.constant 0 : index
    %c0_43 = arith.constant 0 : index
    %c0_44 = arith.constant 0 : index
    %c0_45 = arith.constant 0 : index
    %31 = vector.load %arg7[%c0_42, %c0_43, %c0_44, %c0_45] : memref<2x9x9x8xf32, #tpu.memory_space<vmem>>, vector<2x8x8x8xf32>
    %c0_46 = arith.constant 0 : index
    %c0_47 = arith.constant 0 : index
    %c1_48 = arith.constant 1 : index
    %c0_49 = arith.constant 0 : index
    %32 = vector.load %arg7[%c0_46, %c0_47, %c1_48, %c0_49] : memref<2x9x9x8xf32, #tpu.memory_space<vmem>>, vector<2x8x8x8xf32>
    %c0_50 = arith.constant 0 : index
    %c1_51 = arith.constant 1 : index
    %c0_52 = arith.constant 0 : index
    %c0_53 = arith.constant 0 : index
    %33 = vector.load %arg7[%c0_50, %c1_51, %c0_52, %c0_53] : memref<2x9x9x8xf32, #tpu.memory_space<vmem>>, vector<2x8x8x8xf32>
    %c0_54 = arith.constant 0 : index
    %c1_55 = arith.constant 1 : index
    %c1_56 = arith.constant 1 : index
    %c0_57 = arith.constant 0 : index
    %34 = vector.load %arg7[%c0_54, %c1_55, %c1_56, %c0_57] : memref<2x9x9x8xf32, #tpu.memory_space<vmem>>, vector<2x8x8x8xf32>
    %35 = tpu.concatenate %31, %32, %33, %34 in 3 : vector<2x8x8x8xf32>, vector<2x8x8x8xf32>, vector<2x8x8x8xf32>, vector<2x8x8x8xf32> -> vector<2x8x8x32xf32>
    %36 = vector.shape_cast %35 : vector<2x8x8x32xf32> to vector<128x32xf32>
    %c1_58 = arith.constant 1 : index
    %c0_59 = arith.constant 0 : index
    %c0_60 = arith.constant 0 : index
    %37 = vector.load %arg4[%c1_58, %c0_59, %c0_60] : memref<4x32x8xf32, #tpu.memory_space<vmem>>, vector<1x32x8xf32>
    %38 = vector.shape_cast %37 : vector<1x32x8xf32> to vector<32x8xf32>
    %cst_61 = arith.constant dense<0.000000e+00> : vector<128x8xf32>
    %39 = tpu.matmul %36, %38, %cst_61 {dimension_numbers = #tpu.dot_dimension_numbers<[1], [0], [0], [1], [0, 0, 1, 1], [], []>} : vector<128x32xf32>, vector<32x8xf32>, vector<128x8xf32> -> vector<128x8xf32>
    %40 = vector.broadcast %15 : vector<1x8xf32> to vector<128x8xf32>
    %41 = arith.addf %39, %40 : vector<128x8xf32>
    %42 = vector.shape_cast %41 : vector<128x8xf32> to vector<2x8x8x8xf32>
    %c1_62 = arith.constant 1 : index
    %c0_63 = arith.constant 0 : index
    %c0_64 = arith.constant 0 : index
    %c0_65 = arith.constant 0 : index
    %c0_66 = arith.constant 0 : index
    %43 = vector.load %arg6[%c1_62, %c0_63, %c0_64, %c0_65, %c0_66] : memref<4x2x8x8x8xf32, #tpu.memory_space<vmem>>, vector<1x2x8x8x8xf32>
    %44 = vector.shape_cast %43 : vector<1x2x8x8x8xf32> to vector<2x8x8x8xf32>
    %45 = vector.shape_cast %42 : vector<2x8x8x8xf32> to vector<1x2x8x8x8xf32>
    tpu.vector_store %arg6[%c1_62, %c0_63, %c0_64, %c0_65, %c0_66], %45 {strides = array<i32>} : memref<4x2x8x8x8xf32, #tpu.memory_space<vmem>>, vector<1x2x8x8x8xf32>,
    %c0_67 = arith.constant 0 : index
    %c0_68 = arith.constant 0 : index
    %c0_69 = arith.constant 0 : index
    %c0_70 = arith.constant 0 : index
    %46 = vector.load %arg7[%c0_67, %c0_68, %c0_69, %c0_70] : memref<2x9x9x8xf32, #tpu.memory_space<vmem>>, vector<2x8x8x8xf32>
    %c0_71 = arith.constant 0 : index
    %c0_72 = arith.constant 0 : index
    %c1_73 = arith.constant 1 : index
    %c0_74 = arith.constant 0 : index
    %47 = vector.load %arg7[%c0_71, %c0_72, %c1_73, %c0_74] : memref<2x9x9x8xf32, #tpu.memory_space<vmem>>, vector<2x8x8x8xf32>
    %c0_75 = arith.constant 0 : index
    %c1_76 = arith.constant 1 : index
    %c0_77 = arith.constant 0 : index
    %c0_78 = arith.constant 0 : index
    %48 = vector.load %arg7[%c0_75, %c1_76, %c0_77, %c0_78] : memref<2x9x9x8xf32, #tpu.memory_space<vmem>>, vector<2x8x8x8xf32>
    %c0_79 = arith.constant 0 : index
    %c1_80 = arith.constant 1 : index
    %c1_81 = arith.constant 1 : index
    %c0_82 = arith.constant 0 : index
    %49 = vector.load %arg7[%c0_79, %c1_80, %c1_81, %c0_82] : memref<2x9x9x8xf32, #tpu.memory_space<vmem>>, vector<2x8x8x8xf32>
    %50 = tpu.concatenate %46, %47, %48, %49 in 3 : vector<2x8x8x8xf32>, vector<2x8x8x8xf32>, vector<2x8x8x8xf32>, vector<2x8x8x8xf32> -> vector<2x8x8x32xf32>
    %51 = vector.shape_cast %50 : vector<2x8x8x32xf32> to vector<128x32xf32>
    %c2 = arith.constant 2 : index
    %c0_83 = arith.constant 0 : index
    %c0_84 = arith.constant 0 : index
    %52 = vector.load %arg4[%c2, %c0_83, %c0_84] : memref<4x32x8xf32, #tpu.memory_space<vmem>>, vector<1x32x8xf32>
    %53 = vector.shape_cast %52 : vector<1x32x8xf32> to vector<32x8xf32>
    %cst_85 = arith.constant dense<0.000000e+00> : vector<128x8xf32>
    %54 = tpu.matmul %51, %53, %cst_85 {dimension_numbers = #tpu.dot_dimension_numbers<[1], [0], [0], [1], [0, 0, 1, 1], [], []>} : vector<128x32xf32>, vector<32x8xf32>, vector<128x8xf32> -> vector<128x8xf32>
    %55 = vector.broadcast %15 : vector<1x8xf32> to vector<128x8xf32>
    %56 = arith.addf %54, %55 : vector<128x8xf32>
    %57 = vector.shape_cast %56 : vector<128x8xf32> to vector<2x8x8x8xf32>
    %c2_86 = arith.constant 2 : index
    %c0_87 = arith.constant 0 : index
    %c0_88 = arith.constant 0 : index
    %c0_89 = arith.constant 0 : index
    %c0_90 = arith.constant 0 : index
    %58 = vector.load %arg6[%c2_86, %c0_87, %c0_88, %c0_89, %c0_90] : memref<4x2x8x8x8xf32, #tpu.memory_space<vmem>>, vector<1x2x8x8x8xf32>
    %59 = vector.shape_cast %58 : vector<1x2x8x8x8xf32> to vector<2x8x8x8xf32>
    %60 = vector.shape_cast %57 : vector<2x8x8x8xf32> to vector<1x2x8x8x8xf32>
    tpu.vector_store %arg6[%c2_86, %c0_87, %c0_88, %c0_89, %c0_90], %60 {strides = array<i32>} : memref<4x2x8x8x8xf32, #tpu.memory_space<vmem>>, vector<1x2x8x8x8xf32>,
    %c0_91 = arith.constant 0 : index
    %c0_92 = arith.constant 0 : index
    %c0_93 = arith.constant 0 : index
    %c0_94 = arith.constant 0 : index
    %61 = vector.load %arg7[%c0_91, %c0_92, %c0_93, %c0_94] : memref<2x9x9x8xf32, #tpu.memory_space<vmem>>, vector<2x8x8x8xf32>
    %c0_95 = arith.constant 0 : index
    %c0_96 = arith.constant 0 : index
    %c1_97 = arith.constant 1 : index
    %c0_98 = arith.constant 0 : index
    %62 = vector.load %arg7[%c0_95, %c0_96, %c1_97, %c0_98] : memref<2x9x9x8xf32, #tpu.memory_space<vmem>>, vector<2x8x8x8xf32>
    %c0_99 = arith.constant 0 : index
    %c1_100 = arith.constant 1 : index
    %c0_101 = arith.constant 0 : index
    %c0_102 = arith.constant 0 : index
    %63 = vector.load %arg7[%c0_99, %c1_100, %c0_101, %c0_102] : memref<2x9x9x8xf32, #tpu.memory_space<vmem>>, vector<2x8x8x8xf32>
    %c0_103 = arith.constant 0 : index
    %c1_104 = arith.constant 1 : index
    %c1_105 = arith.constant 1 : index
    %c0_106 = arith.constant 0 : index
    %64 = vector.load %arg7[%c0_103, %c1_104, %c1_105, %c0_106] : memref<2x9x9x8xf32, #tpu.memory_space<vmem>>, vector<2x8x8x8xf32>
    %65 = tpu.concatenate %61, %62, %63, %64 in 3 : vector<2x8x8x8xf32>, vector<2x8x8x8xf32>, vector<2x8x8x8xf32>, vector<2x8x8x8xf32> -> vector<2x8x8x32xf32>
    %66 = vector.shape_cast %65 : vector<2x8x8x32xf32> to vector<128x32xf32>
    %c3 = arith.constant 3 : index
    %c0_107 = arith.constant 0 : index
    %c0_108 = arith.constant 0 : index
    %67 = vector.load %arg4[%c3, %c0_107, %c0_108] : memref<4x32x8xf32, #tpu.memory_space<vmem>>, vector<1x32x8xf32>
    %68 = vector.shape_cast %67 : vector<1x32x8xf32> to vector<32x8xf32>
    %cst_109 = arith.constant dense<0.000000e+00> : vector<128x8xf32>
    %69 = tpu.matmul %66, %68, %cst_109 {dimension_numbers = #tpu.dot_dimension_numbers<[1], [0], [0], [1], [0, 0, 1, 1], [], []>} : vector<128x32xf32>, vector<32x8xf32>, vector<128x8xf32> -> vector<128x8xf32>
    %70 = vector.broadcast %15 : vector<1x8xf32> to vector<128x8xf32>
    %71 = arith.addf %69, %70 : vector<128x8xf32>
    %72 = vector.shape_cast %71 : vector<128x8xf32> to vector<2x8x8x8xf32>
    %c3_110 = arith.constant 3 : index
    %c0_111 = arith.constant 0 : index
    %c0_112 = arith.constant 0 : index
    %c0_113 = arith.constant 0 : index
    %c0_114 = arith.constant 0 : index
    %73 = vector.load %arg6[%c3_110, %c0_111, %c0_112, %c0_113, %c0_114] : memref<4x2x8x8x8xf32, #tpu.memory_space<vmem>>, vector<1x2x8x8x8xf32>
    %74 = vector.shape_cast %73 : vector<1x2x8x8x8xf32> to vector<2x8x8x8xf32>
    %75 = vector.shape_cast %72 : vector<2x8x8x8xf32> to vector<1x2x8x8x8xf32>
    tpu.vector_store %arg6[%c3_110, %c0_111, %c0_112, %c0_113, %c0_114], %75 {strides = array<i32>} : memref<4x2x8x8x8xf32, #tpu.memory_space<vmem>>, vector<1x2x8x8x8xf32>,
    return
  }
  func.func @transform_0(%arg0: i32) -> (i32, i32) {
    %c0_i32 = arith.constant 0 : i32
    %c0_i32_0 = arith.constant 0 : i32
    %c0_i32_1 = arith.constant 0 : i32
    return %c0_i32, %c0_i32_0 : i32, i32
  }
  func.func @transform_1(%arg0: i32) -> (i32, i32) {
    %c0_i32 = arith.constant 0 : i32
    %c0_i32_0 = arith.constant 0 : i32
    %c0_i32_1 = arith.constant 0 : i32
    return %c0_i32, %c0_i32_0 : i32, i32
  }
  func.func @transform_2(%arg0: i32) -> (i32, i32) {
    %c0_i32 = arith.constant 0 : i32
    %c0_i32_0 = arith.constant 0 : i32
    %c0_i32_1 = arith.constant 0 : i32
    return %c0_i32, %c0_i32_0 : i32, i32
  }
  func.func @transform_3(%arg0: i32) -> (i32, i32, i32) {
    %c0_i32 = arith.constant 0 : i32
    %c0_i32_0 = arith.constant 0 : i32
    %c0_i32_1 = arith.constant 0 : i32
    %c0_i32_2 = arith.constant 0 : i32
    return %c0_i32, %c0_i32_0, %c0_i32_1 : i32, i32, i32
  }
  func.func @transform_4(%arg0: i32) -> (i32, i32) {
    %c0_i32 = arith.constant 0 : i32
    %c0_i32_0 = arith.constant 0 : i32
    %c0_i32_1 = arith.constant 0 : i32
    return %c0_i32, %c0_i32_0 : i32, i32
  }
  func.func @transform_5(%arg0: i32) -> (i32, i32, i32, i32, i32) {
    %c0_i32 = arith.constant 0 : i32
    %c0_i32_0 = arith.constant 0 : i32
    %c0_i32_1 = arith.constant 0 : i32
    %c0_i32_2 = arith.constant 0 : i32
    %c0_i32_3 = arith.constant 0 : i32
    %c0_i32_4 = arith.constant 0 : i32
    return %c0_i32, %c0_i32_0, %c0_i32_1, %c0_i32_2, %c0_i32_3 : i32, i32, i32, i32, i32
  }
}

</mosaic_0001>

<llo_original>
// kernel: double_deconv_forward.1
$region0: #{double_deconv_forward.1}
  #allocation0 [shape = 'u32[]', space=smem, size = 0x4, offset = 0x4, fixed_abs, tag = 'smem constant byte address 0x4 - core index']
  #allocation1 [shape = 'u32[144,128]{1,0:T(1,128)}', space=vmem, size = 0x12000, scoped, tag = 'internal scratch']
  #allocation2 [shape = 'f32[2,9,9,8]{3,2,1,0:T(8,128)}', space=vmem, size = 0x24000, scoped, tag = 'scratch operand']
  %s0 = inlined_call_operand.vmem [shape: f32[128,36], index: 0, kind: input, shape index: {}]
  %s1 = inlined_call_operand.vmem [shape: f32[36,8], index: 1, kind: input, shape index: {}]
  %s2 = inlined_call_operand.vmem [shape: f32[1,8], index: 2, kind: input, shape index: {}]
  %s3 = inlined_call_operand.vmem [shape: f32[4,32,8], index: 3, kind: input, shape index: {}]
  %s4 = inlined_call_operand.vmem [shape: f32[1,8], index: 4, kind: input, shape index: {}]
  %s5 = inlined_call_operand.vmem [shape: f32[4,2,8,8,8], index: 5, kind: output, shape index: {}]
  %s6 = sld [smem:[#allocation0]]
  $region30: #{double_deconv_forward.1} parent=0
    _
  %s8 = ssub.s32 1, %s6
  %s9 = scalar_select 0, %s8, %s6
  // Predicated region
  $region2: #{double_deconv_forward.1} parent=0 // pred_check
    _
  $region3: #{double_deconv_forward.1} parent=0 // pred_check_branch
    %11 = sbr.rel (0) target = $region5
  $region4: #{double_deconv_forward.1} parent=0 // pred_region
    _
  $region5: #{double_deconv_forward.1} parent=0 // pred_fallthru
    _
  // Predicated region
  $region6: #{double_deconv_forward.1} parent=0 // pred_check
    _
  $region7: #{double_deconv_forward.1} parent=0 // pred_check_branch
    %13 = sbr.rel (0) target = $region9
  $region8: #{double_deconv_forward.1} parent=0 // pred_region
    _
  $region9: #{double_deconv_forward.1} parent=0 // pred_fallthru
    _
  // Predicated region
  $region10: #{double_deconv_forward.1} parent=0 // pred_check
    _
  $region11: #{double_deconv_forward.1} parent=0 // pred_check_branch
    %15 = sbr.rel (0) target = $region13
  $region12: #{double_deconv_forward.1} parent=0 // pred_region
    _
  $region13: #{double_deconv_forward.1} parent=0 // pred_fallthru
    _
  // Predicated region
  $region14: #{double_deconv_forward.1} parent=0 // pred_check
    _
  $region15: #{double_deconv_forward.1} parent=0 // pred_check_branch
    %17 = sbr.rel (0) target = $region17
  $region16: #{double_deconv_forward.1} parent=0 // pred_region
    _
  $region17: #{double_deconv_forward.1} parent=0 // pred_fallthru
    _
  // Predicated region
  $region18: #{double_deconv_forward.1} parent=0 // pred_check
    _
  $region19: #{double_deconv_forward.1} parent=0 // pred_check_branch
    %19 = sbr.rel (0) target = $region21
  $region20: #{double_deconv_forward.1} parent=0 // pred_region
    _
  $region21: #{double_deconv_forward.1} parent=0 // pred_fallthru
    _
  %v20 = vld [vmem:[%s0] sm:$0xff]
  %v21 = vld [vmem:[%s0 + $0x8] sm:$0xff]
  %v22 = vld [vmem:[%s0 + $0x10] sm:$0xff]
  %v23 = vld [vmem:[%s0 + $0x18] sm:$0xff]
  %v24 = vld [vmem:[%s0 + $0x20] sm:$0xff]
  %v25 = vld [vmem:[%s0 + $0x28] sm:$0xff]
  %v26 = vld [vmem:[%s0 + $0x30] sm:$0xff]
  %v27 = vld [vmem:[%s0 + $0x38] sm:$0xff]
  %v28 = vld [vmem:[%s0 + $0x40] sm:$0xff]
  %v29 = vld [vmem:[%s0 + $0x48] sm:$0xff]
  %v30 = vld [vmem:[%s0 + $0x50] sm:$0xff]
  %v31 = vld [vmem:[%s0 + $0x58] sm:$0xff]
  %v32 = vld [vmem:[%s0 + $0x60] sm:$0xff]
  %v33 = vld [vmem:[%s0 + $0x68] sm:$0xff]
  %v34 = vld [vmem:[%s0 + $0x70] sm:$0xff]
  %v35 = vld [vmem:[%s0 + $0x78] sm:$0xff]
  %v36 = vld [vmem:[%s1] sm:$0xff]
  %v37 = vld [vmem:[%s1 + $0x8] sm:$0xff]
  %v38 = vld [vmem:[%s1 + $0x10] sm:$0xff]
  %v39 = vld [vmem:[%s1 + $0x18] sm:$0xff]
  %v40 = vld [vmem:[%s1 + $0x20] sm:$0xf]
  %v41 = vld [vmem:[%s2] sm:$0x1]
  %v43 = vlaneseq
  %v44 = vshrl.u32 %v43, 7
  %v45 = vsub.s32 0, %v44
  %v46 = vrot.slane %v41, %v45
  %vm48 = vcmask 293888
  %v50 = vsel %vm48, %v20, 0
  %v53 = vsel %vm48, %v21, 0
  %v56 = vsel %vm48, %v22, 0
  %v59 = vsel %vm48, %v23, 0
  %v62 = vsel %vm48, %v24, 0
  %v65 = vsel %vm48, %v25, 0
  %v68 = vsel %vm48, %v26, 0
  %v71 = vsel %vm48, %v27, 0
  %v74 = vsel %vm48, %v28, 0
  %v77 = vsel %vm48, %v29, 0
  %v80 = vsel %vm48, %v30, 0
  %v83 = vsel %vm48, %v31, 0
  %v86 = vsel %vm48, %v32, 0
  %v89 = vsel %vm48, %v33, 0
  %v92 = vsel %vm48, %v34, 0
  %v95 = vsel %vm48, %v35, 0
  %vm97 = vcmask 1043456
  %v99 = vsel %vm97, %v40, 0
  %101 = vmatprep.subr.mxu0 0.0
  %102 = vmatpush1.msra.mxu0 %v36
  %103 = vmatprep.subr.mxu0 0.0
  %104 = vmatpush1.msra.mxu0 %v37
  %105 = vmatprep.subr.mxu0 0.0
  %106 = vmatpush1.msra.mxu0 %v38
  %107 = vmatprep.subr.mxu0 0.0
  %108 = vmatpush1.msra.mxu0 %v39
  %109 = vmatprep.subr.mxu0 0.0
  %110 = vmatpush1.msra.mxu0 %v99
  %111 = vmatprep.subr.mxu0 0.0
  %112 = vmatpush1.msra.mxu0 0.0
  %113 = vmatprep.subr.mxu0 0.0
  %114 = vmatpush1.msra.mxu0 0.0
  %115 = vmatprep.subr.mxu0 0.0
  %116 = vmatpush1.msra.mxu0 0.0
  %117 = vmatprep.subr.mxu0 0.0
  %118 = vmatpush1.msra.mxu0 0.0
  %119 = vmatprep.subr.mxu0 0.0
  %120 = vmatpush1.msra.mxu0 0.0
  %121 = vmatprep.subr.mxu0 0.0
  %122 = vmatpush1.msra.mxu0 0.0
  %123 = vmatprep.subr.mxu0 0.0
  %124 = vmatpush1.msra.mxu0 0.0
  %125 = vmatprep.subr.mxu0 0.0
  %126 = vmatpush1.msra.mxu0 0.0
  %127 = vmatprep.subr.mxu0 0.0
  %128 = vmatpush1.msra.mxu0 0.0
  %129 = vmatprep.subr.mxu0 0.0
  %130 = vmatpush1.msra.mxu0 0.0
  %131 = vmatprep.subr.mxu0 0.0
  %132 = vmatpush1.msra.mxu0 0.0
  %133 = vmatprep.subr.mxu0 0.0
  %134 = vmatpush1.msra.mxu0 0.0
  %135 = vmatprep.subr.mxu0 0.0
  %136 = vmatpush1.msra.mxu0 0.0
  %137 = vmatprep.subr.mxu0 0.0
  %138 = vmatpush1.msra.mxu0 0.0
  %139 = vmatprep.subr.mxu0 0.0
  %140 = vmatpush1.msra.mxu0 0.0
  %141 = vmatprep.subr.mxu0 0.0
  %142 = vmatpush1.msra.mxu0 0.0
  %143 = vmatprep.subr.mxu0 0.0
  %144 = vmatpush1.msra.mxu0 0.0
  %145 = vmatprep.subr.mxu0 0.0
  %146 = vmatpush1.msra.mxu0 0.0
  %147 = vmatprep.subr.mxu0 0.0
  %148 = vmatpush1.msra.mxu0 0.0
  %149 = vmatprep.subr.mxu0 0.0
  %150 = vmatpush1.msra.mxu0 0.0
  %151 = vmatprep.subr.mxu0 0.0
  %152 = vmatpush1.msra.mxu0 0.0
  %153 = vmatprep.subr.mxu0 0.0
  %154 = vmatpush1.msra.mxu0 0.0
  %155 = vmatprep.subr.mxu0 0.0
  %156 = vmatpush1.msra.mxu0 0.0
  %157 = vmatprep.subr.mxu0 0.0
  %158 = vmatpush1.msra.mxu0 0.0
  %159 = vmatprep.subr.mxu0 0.0
  %160 = vmatpush1.msra.mxu0 0.0
  %161 = vmatprep.subr.mxu0 0.0
  %162 = vmatpush1.msra.mxu0 0.0
  %163 = vmatprep.subr.mxu0 0.0
  %164 = vmatpush1.msra.mxu0 0.0
  %165 = vmatprep.mubr.f32.mxu0 0.0
  %166 = vmatmul.mubr.f32.gmra.mrb[0].mxu0 %v50
  %v167 = vpop.f32.mrb[0].mxu0
  %v168 = vadd.f32 %v46, %v167
  %v169 = vpop.f32.mrb[0].mxu0
  %170 = vmatprep.mubr.f32.mxu0 0.0
  %171 = vmatmul.mubr.f32.gmra.mrb[0].mxu0 %v53
  %v172 = vpop.f32.mrb[0].mxu0
  %v173 = vadd.f32 %v46, %v172
  %v174 = vpop.f32.mrb[0].mxu0
  %175 = vmatprep.mubr.f32.mxu0 0.0
  %176 = vmatmul.mubr.f32.gmra.mrb[0].mxu0 %v56
  %v177 = vpop.f32.mrb[0].mxu0
  %v178 = vadd.f32 %v46, %v177
  %v179 = vpop.f32.mrb[0].mxu0
  %180 = vmatprep.mubr.f32.mxu0 0.0
  %181 = vmatmul.mubr.f32.gmra.mrb[0].mxu0 %v59
  %v182 = vpop.f32.mrb[0].mxu0
  %v183 = vadd.f32 %v46, %v182
  %v184 = vpop.f32.mrb[0].mxu0
  %185 = vmatprep.mubr.f32.mxu0 0.0
  %186 = vmatmul.mubr.f32.gmra.mrb[0].mxu0 %v62
  %v187 = vpop.f32.mrb[0].mxu0
  %v188 = vadd.f32 %v46, %v187
  %v189 = vpop.f32.mrb[0].mxu0
  %190 = vmatprep.mubr.f32.mxu0 0.0
  %191 = vmatmul.mubr.f32.gmra.mrb[0].mxu0 %v65
  %v192 = vpop.f32.mrb[0].mxu0
  %v193 = vadd.f32 %v46, %v192
  %v194 = vpop.f32.mrb[0].mxu0
  %195 = vmatprep.mubr.f32.mxu0 0.0
  %196 = vmatmul.mubr.f32.gmra.mrb[0].mxu0 %v68
  %v197 = vpop.f32.mrb[0].mxu0
  %v198 = vadd.f32 %v46, %v197
  %v199 = vpop.f32.mrb[0].mxu0
  %200 = vmatprep.mubr.f32.mxu0 0.0
  %201 = vmatmul.mubr.f32.gmra.mrb[0].mxu0 %v71
  %v202 = vpop.f32.mrb[0].mxu0
  %v203 = vadd.f32 %v46, %v202
  %v204 = vpop.f32.mrb[0].mxu0
  %205 = vmatprep.mubr.f32.mxu0 0.0
  %206 = vmatmul.mubr.f32.gmra.mrb[0].mxu0 %v74
  %v207 = vpop.f32.mrb[0].mxu0
  %v208 = vadd.f32 %v46, %v207
  %v209 = vpop.f32.mrb[0].mxu0
  %210 = vmatprep.mubr.f32.mxu0 0.0
  %211 = vmatmul.mubr.f32.gmra.mrb[0].mxu0 %v77
  %v212 = vpop.f32.mrb[0].mxu0
  %v213 = vadd.f32 %v46, %v212
  %v214 = vpop.f32.mrb[0].mxu0
  %215 = vmatprep.mubr.f32.mxu0 0.0
  %216 = vmatmul.mubr.f32.gmra.mrb[0].mxu0 %v80
  %v217 = vpop.f32.mrb[0].mxu0
  %v218 = vadd.f32 %v46, %v217
  %v219 = vpop.f32.mrb[0].mxu0
  %220 = vmatprep.mubr.f32.mxu0 0.0
  %221 = vmatmul.mubr.f32.gmra.mrb[0].mxu0 %v83
  %v222 = vpop.f32.mrb[0].mxu0
  %v223 = vadd.f32 %v46, %v222
  %v224 = vpop.f32.mrb[0].mxu0
  %225 = vmatprep.mubr.f32.mxu0 0.0
  %226 = vmatmul.mubr.f32.gmra.mrb[0].mxu0 %v86
  %v227 = vpop.f32.mrb[0].mxu0
  %v228 = vadd.f32 %v46, %v227
  %v229 = vpop.f32.mrb[0].mxu0
  %230 = vmatprep.mubr.f32.mxu0 0.0
  %231 = vmatmul.mubr.f32.gmra.mrb[0].mxu0 %v89
  %v232 = vpop.f32.mrb[0].mxu0
  %v233 = vadd.f32 %v46, %v232
  %v234 = vpop.f32.mrb[0].mxu0
  %235 = vmatprep.mubr.f32.mxu0 0.0
  %236 = vmatmul.mubr.f32.gmra.mrb[0].mxu0 %v92
  %v237 = vpop.f32.mrb[0].mxu0
  %v238 = vadd.f32 %v46, %v237
  %v239 = vpop.f32.mrb[0].mxu0
  %240 = vmatprep.mubr.f32.mxu0 0.0
  %241 = vmatmul.mubr.f32.gmra.mrb[0].mxu0 %v95
  %v242 = vpop.f32.mrb[0].mxu0
  %v243 = vadd.f32 %v46, %v242
  %v244 = vpop.f32.mrb[0].mxu0
  %245 = vdwg.mxu0
  %vm246 = vcmp.gt.f32.partialorder %v168, 0.0
  %vm247 = vcmp.gt.f32.partialorder %v173, 0.0
  %vm248 = vcmp.gt.f32.partialorder %v178, 0.0
  %vm249 = vcmp.gt.f32.partialorder %v183, 0.0
  %vm250 = vcmp.gt.f32.partialorder %v188, 0.0
  %vm251 = vcmp.gt.f32.partialorder %v193, 0.0
  %vm252 = vcmp.gt.f32.partialorder %v198, 0.0
  %vm253 = vcmp.gt.f32.partialorder %v203, 0.0
  %vm254 = vcmp.gt.f32.partialorder %v208, 0.0
  %vm255 = vcmp.gt.f32.partialorder %v213, 0.0
  %vm256 = vcmp.gt.f32.partialorder %v218, 0.0
  %vm257 = vcmp.gt.f32.partialorder %v223, 0.0
  %vm258 = vcmp.gt.f32.partialorder %v228, 0.0
  %vm259 = vcmp.gt.f32.partialorder %v233, 0.0
  %vm260 = vcmp.gt.f32.partialorder %v238, 0.0
  %vm261 = vcmp.gt.f32.partialorder %v243, 0.0
  %v262 = vmul.f32 %v168, 0.01
  %v263 = vmul.f32 %v173, 0.01
  %v264 = vmul.f32 %v178, 0.01
  %v265 = vmul.f32 %v183, 0.01
  %v266 = vmul.f32 %v188, 0.01
  %v267 = vmul.f32 %v193, 0.01
  %v268 = vmul.f32 %v198, 0.01
  %v269 = vmul.f32 %v203, 0.01
  %v270 = vmul.f32 %v208, 0.01
  %v271 = vmul.f32 %v213, 0.01
  %v272 = vmul.f32 %v218, 0.01
  %v273 = vmul.f32 %v223, 0.01
  %v274 = vmul.f32 %v228, 0.01
  %v275 = vmul.f32 %v233, 0.01
  %v276 = vmul.f32 %v238, 0.01
  %v277 = vmul.f32 %v243, 0.01
  %v278 = vsel %vm246, %v168, %v262
  %v279 = vsel %vm247, %v173, %v263
  %v280 = vsel %vm248, %v178, %v264
  %v281 = vsel %vm249, %v183, %v265
  %v282 = vsel %vm250, %v188, %v266
  %v283 = vsel %vm251, %v193, %v267
  %v284 = vsel %vm252, %v198, %v268
  %v285 = vsel %vm253, %v203, %v269
  %v286 = vsel %vm254, %v208, %v270
  %v287 = vsel %vm255, %v213, %v271
  %v288 = vsel %vm256, %v218, %v272
  %v289 = vsel %vm257, %v223, %v273
  %v290 = vsel %vm258, %v228, %v274
  %v291 = vsel %vm259, %v233, %v275
  %v292 = vsel %vm260, %v238, %v276
  %v293 = vsel %vm261, %v243, %v277
  %vm294 = vcmask 64512
  %295 = vst.msk [vmem:[#allocation2] sm:$0xff] %vm294, 0.0
  %vm296 = vcmask 57344
  %297 = vst.msk [vmem:[#allocation2 + $0x8] sm:$0x1] %vm296, 0.0
  %298 = vst.msk [vmem:[#allocation2 + $0x10] sm:$0xff] %vm294, 0.0
  %299 = vst.msk [vmem:[#allocation2 + $0x18] sm:$0x1] %vm296, 0.0
  %300 = vst.msk [vmem:[#allocation2 + $0x20] sm:$0xff] %vm294, 0.0
  %301 = vst.msk [vmem:[#allocation2 + $0x28] sm:$0x1] %vm296, 0.0
  %302 = vst.msk [vmem:[#allocation2 + $0x30] sm:$0xff] %vm294, 0.0
  %303 = vst.msk [vmem:[#allocation2 + $0x38] sm:$0x1] %vm296, 0.0
  %304 = vst.msk [vmem:[#allocation2 + $0x40] sm:$0xff] %vm294, 0.0
  %305 = vst.msk [vmem:[#allocation2 + $0x48] sm:$0x1] %vm296, 0.0
  %306 = vst.msk [vmem:[#allocation2 + $0x50] sm:$0xff] %vm294, 0.0
  %307 = vst.msk [vmem:[#allocation2 + $0x58] sm:$0x1] %vm296, 0.0
  %308 = vst.msk [vmem:[#allocation2 + $0x60] sm:$0xff] %vm294, 0.0
  %309 = vst.msk [vmem:[#allocation2 + $0x68] sm:$0x1] %vm296, 0.0
  %310 = vst.msk [vmem:[#allocation2 + $0x70] sm:$0xff] %vm294, 0.0
  %311 = vst.msk [vmem:[#allocation2 + $0x78] sm:$0x1] %vm296, 0.0
  %312 = vst.msk [vmem:[#allocation2 + $0x80] sm:$0xff] %vm294, 0.0
  %313 = vst.msk [vmem:[#allocation2 + $0x88] sm:$0x1] %vm296, 0.0
  %314 = vst.msk [vmem:[#allocation2 + $0x90] sm:$0xff] %vm294, 0.0
  %315 = vst.msk [vmem:[#allocation2 + $0x98] sm:$0x1] %vm296, 0.0
  %316 = vst.msk [vmem:[#allocation2 + $0xa0] sm:$0xff] %vm294, 0.0
  %317 = vst.msk [vmem:[#allocation2 + $0xa8] sm:$0x1] %vm296, 0.0
  %318 = vst.msk [vmem:[#allocation2 + $0xb0] sm:$0xff] %vm294, 0.0
  %319 = vst.msk [vmem:[#allocation2 + $0xb8] sm:$0x1] %vm296, 0.0
  %320 = vst.msk [vmem:[#allocation2 + $0xc0] sm:$0xff] %vm294, 0.0
  %321 = vst.msk [vmem:[#allocation2 + $0xc8] sm:$0x1] %vm296, 0.0
  %322 = vst.msk [vmem:[#allocation2 + $0xd0] sm:$0xff] %vm294, 0.0
  %323 = vst.msk [vmem:[#allocation2 + $0xd8] sm:$0x1] %vm296, 0.0
  %324 = vst.msk [vmem:[#allocation2 + $0xe0] sm:$0xff] %vm294, 0.0
  %325 = vst.msk [vmem:[#allocation2 + $0xe8] sm:$0x1] %vm296, 0.0
  %326 = vst.msk [vmem:[#allocation2 + $0xf0] sm:$0xff] %vm294, 0.0
  %327 = vst.msk [vmem:[#allocation2 + $0xf8] sm:$0x1] %vm296, 0.0
  %328 = vst.msk [vmem:[#allocation2 + $0x100] sm:$0xff] %vm294, 0.0
  %329 = vst.msk [vmem:[#allocation2 + $0x108] sm:$0x1] %vm296, 0.0
  %330 = vst.msk [vmem:[#allocation2 + $0x110] sm:$0xff] %vm294, 0.0
  %331 = vst.msk [vmem:[#allocation2 + $0x118] sm:$0x1] %vm296, 0.0
  %332 = vst.msk [vmem:[#allocation2] sm:$0xff] %vm294, %v278
  %333 = vst.msk [vmem:[#allocation2 + $0x10] sm:$0xff] %vm294, %v279
  %334 = vst.msk [vmem:[#allocation2 + $0x20] sm:$0xff] %vm294, %v280
  %335 = vst.msk [vmem:[#allocation2 + $0x30] sm:$0xff] %vm294, %v281
  %336 = vst.msk [vmem:[#allocation2 + $0x40] sm:$0xff] %vm294, %v282
  %337 = vst.msk [vmem:[#allocation2 + $0x50] sm:$0xff] %vm294, %v283
  %338 = vst.msk [vmem:[#allocation2 + $0x60] sm:$0xff] %vm294, %v284
  %339 = vst.msk [vmem:[#allocation2 + $0x70] sm:$0xff] %vm294, %v285
  %340 = vst.msk [vmem:[#allocation2 + $0x90] sm:$0xff] %vm294, %v286
  %341 = vst.msk [vmem:[#allocation2 + $0xa0] sm:$0xff] %vm294, %v287
  %342 = vst.msk [vmem:[#allocation2 + $0xb0] sm:$0xff] %vm294, %v288
  %343 = vst.msk [vmem:[#allocation2 + $0xc0] sm:$0xff] %vm294, %v289
  %344 = vst.msk [vmem:[#allocation2 + $0xd0] sm:$0xff] %vm294, %v290
  %345 = vst.msk [vmem:[#allocation2 + $0xe0] sm:$0xff] %vm294, %v291
  %346 = vst.msk [vmem:[#allocation2 + $0xf0] sm:$0xff] %vm294, %v292
  %347 = vst.msk [vmem:[#allocation2 + $0x100] sm:$0xff] %vm294, %v293
  %v348 = vld [vmem:[%s4] sm:$0x1]
  %v349 = vld [vmem:[#allocation2] sm:$0xff]
  %v350 = vld [vmem:[#allocation2 + $0x10] sm:$0xff]
  %v351 = vld [vmem:[#allocation2 + $0x20] sm:$0xff]
  %v352 = vld [vmem:[#allocation2 + $0x30] sm:$0xff]
  %v353 = vld [vmem:[#allocation2 + $0x40] sm:$0xff]
  %v354 = vld [vmem:[#allocation2 + $0x50] sm:$0xff]
  %v355 = vld [vmem:[#allocation2 + $0x60] sm:$0xff]
  %v356 = vld [vmem:[#allocation2 + $0x70] sm:$0xff]
  %v357 = vld [vmem:[#allocation2 + $0x90] sm:$0xff]
  %v358 = vld [vmem:[#allocation2 + $0xa0] sm:$0xff]
  %v359 = vld [vmem:[#allocation2 + $0xb0] sm:$0xff]
  %v360 = vld [vmem:[#allocation2 + $0xc0] sm:$0xff]
  %v361 = vld [vmem:[#allocation2 + $0xd0] sm:$0xff]
  %v362 = vld [vmem:[#allocation2 + $0xe0] sm:$0xff]
  %v363 = vld [vmem:[#allocation2 + $0xf0] sm:$0xff]
  %v364 = vld [vmem:[#allocation2 + $0x100] sm:$0xff]
  %v365 = vld [vmem:[#allocation2 + $0x1] sm:$0xff]
  %v366 = vld [vmem:[#allocation2 + $0x11] sm:$0xff]
  %v367 = vld [vmem:[#allocation2 + $0x21] sm:$0xff]
  %v368 = vld [vmem:[#allocation2 + $0x31] sm:$0xff]
  %v369 = vld [vmem:[#allocation2 + $0x41] sm:$0xff]
  %v370 = vld [vmem:[#allocation2 + $0x51] sm:$0xff]
  %v371 = vld [vmem:[#allocation2 + $0x61] sm:$0xff]
  %v372 = vld [vmem:[#allocation2 + $0x71] sm:$0xff]
  %v373 = vld [vmem:[#allocation2 + $0x91] sm:$0xff]
  %v374 = vld [vmem:[#allocation2 + $0xa1] sm:$0xff]
  %v375 = vld [vmem:[#allocation2 + $0xb1] sm:$0xff]
  %v376 = vld [vmem:[#allocation2 + $0xc1] sm:$0xff]
  %v377 = vld [vmem:[#allocation2 + $0xd1] sm:$0xff]
  %v378 = vld [vmem:[#allocation2 + $0xe1] sm:$0xff]
  %v379 = vld [vmem:[#allocation2 + $0xf1] sm:$0xff]
  %v380 = vld [vmem:[#allocation2 + $0x101] sm:$0xff]
  %s381 = scalar_lea.vmem [#allocation2], 16
  %v382 = vld [vmem:[%s381] sm:$0xff]
  %v383 = vld [vmem:[%s381 + $0x10] sm:$0xff]
  %v384 = vld [vmem:[%s381 + $0x20] sm:$0xff]
  %v385 = vld [vmem:[%s381 + $0x30] sm:$0xff]
  %v386 = vld [vmem:[%s381 + $0x40] sm:$0xff]
  %v387 = vld [vmem:[%s381 + $0x50] sm:$0xff]
  %v388 = vld [vmem:[%s381 + $0x60] sm:$0xff]
  %v389 = vld [vmem:[%s381 + $0x70] sm:$0xff]
  %v390 = vld [vmem:[%s381 + $0x90] sm:$0xff]
  %v391 = vld [vmem:[%s381 + $0xa0] sm:$0xff]
  %v392 = vld [vmem:[%s381 + $0xb0] sm:$0xff]
  %v393 = vld [vmem:[%s381 + $0xc0] sm:$0xff]
  %v394 = vld [vmem:[%s381 + $0xd0] sm:$0xff]
  %v395 = vld [vmem:[%s381 + $0xe0] sm:$0xff]
  %v396 = vld [vmem:[%s381 + $0xf0] sm:$0xff]
  %v397 = vld [vmem:[%s381 + $0x100] sm:$0xff]
  %v398 = vld [vmem:[%s381 + $0x1] sm:$0xff]
  %v399 = vld [vmem:[%s381 + $0x11] sm:$0xff]
  %v400 = vld [vmem:[%s381 + $0x21] sm:$0xff]
  %v401 = vld [vmem:[%s381 + $0x31] sm:$0xff]
  %v402 = vld [vmem:[%s381 + $0x41] sm:$0xff]
  %v403 = vld [vmem:[%s381 + $0x51] sm:$0xff]
  %v404 = vld [vmem:[%s381 + $0x61] sm:$0xff]
  %v405 = vld [vmem:[%s381 + $0x71] sm:$0xff]
  %v406 = vld [vmem:[%s381 + $0x91] sm:$0xff]
  %v407 = vld [vmem:[%s381 + $0xa1] sm:$0xff]
  %v408 = vld [vmem:[%s381 + $0xb1] sm:$0xff]
  %v409 = vld [vmem:[%s381 + $0xc1] sm:$0xff]
  %v410 = vld [vmem:[%s381 + $0xd1] sm:$0xff]
  %v411 = vld [vmem:[%s381 + $0xe1] sm:$0xff]
  %v412 = vld [vmem:[%s381 + $0xf1] sm:$0xff]
  %v413 = vld [vmem:[%s381 + $0x101] sm:$0xff]
  %430 = vrot.lane.b32.xlu0 %v365, 8
  %v431 = vpop.permute.xlu0 %430
  %432 = vrot.lane.b32.xlu0 %v366, 8
  %v433 = vpop.permute.xlu0 %432
  %434 = vrot.lane.b32.xlu0 %v367, 8
  %v435 = vpop.permute.xlu0 %434
  %436 = vrot.lane.b32.xlu0 %v368, 8
  %v437 = vpop.permute.xlu0 %436
  %438 = vrot.lane.b32.xlu0 %v369, 8
  %v439 = vpop.permute.xlu0 %438
  %440 = vrot.lane.b32.xlu0 %v370, 8
  %v441 = vpop.permute.xlu0 %440
  %442 = vrot.lane.b32.xlu0 %v371, 8
  %v443 = vpop.permute.xlu0 %442
  %444 = vrot.lane.b32.xlu0 %v372, 8
  %v445 = vpop.permute.xlu0 %444
  %446 = vrot.lane.b32.xlu0 %v373, 8
  %v447 = vpop.permute.xlu0 %446
  %448 = vrot.lane.b32.xlu0 %v374, 8
  %v449 = vpop.permute.xlu0 %448
  %450 = vrot.lane.b32.xlu0 %v375, 8
  %v451 = vpop.permute.xlu0 %450
  %452 = vrot.lane.b32.xlu0 %v376, 8
  %v453 = vpop.permute.xlu0 %452
  %454 = vrot.lane.b32.xlu0 %v377, 8
  %v455 = vpop.permute.xlu0 %454
  %456 = vrot.lane.b32.xlu0 %v378, 8
  %v457 = vpop.permute.xlu0 %456
  %458 = vrot.lane.b32.xlu0 %v379, 8
  %v459 = vpop.permute.xlu0 %458
  %460 = vrot.lane.b32.xlu0 %v380, 8
  %v461 = vpop.permute.xlu0 %460
  %494 = vrot.lane.b32.xlu0 %v382, 16
  %v495 = vpop.permute.xlu0 %494
  %496 = vrot.lane.b32.xlu0 %v383, 16
  %v497 = vpop.permute.xlu0 %496
  %498 = vrot.lane.b32.xlu0 %v384, 16
  %v499 = vpop.permute.xlu0 %498
  %500 = vrot.lane.b32.xlu0 %v385, 16
  %v501 = vpop.permute.xlu0 %500
  %502 = vrot.lane.b32.xlu0 %v386, 16
  %v503 = vpop.permute.xlu0 %502
  %504 = vrot.lane.b32.xlu0 %v387, 16
  %v505 = vpop.permute.xlu0 %504
  %506 = vrot.lane.b32.xlu0 %v388, 16
  %v507 = vpop.permute.xlu0 %506
  %508 = vrot.lane.b32.xlu0 %v389, 16
  %v509 = vpop.permute.xlu0 %508
  %510 = vrot.lane.b32.xlu0 %v390, 16
  %v511 = vpop.permute.xlu0 %510
  %512 = vrot.lane.b32.xlu0 %v391, 16
  %v513 = vpop.permute.xlu0 %512
  %514 = vrot.lane.b32.xlu0 %v392, 16
  %v515 = vpop.permute.xlu0 %514
  %516 = vrot.lane.b32.xlu0 %v393, 16
  %v517 = vpop.permute.xlu0 %516
  %518 = vrot.lane.b32.xlu0 %v394, 16
  %v519 = vpop.permute.xlu0 %518
  %520 = vrot.lane.b32.xlu0 %v395, 16
  %v521 = vpop.permute.xlu0 %520
  %522 = vrot.lane.b32.xlu0 %v396, 16
  %v523 = vpop.permute.xlu0 %522
  %524 = vrot.lane.b32.xlu0 %v397, 16
  %v525 = vpop.permute.xlu0 %524
  %558 = vrot.lane.b32.xlu0 %v398, 24
  %v559 = vpop.permute.xlu0 %558
  %560 = vrot.lane.b32.xlu0 %v399, 24
  %v561 = vpop.permute.xlu0 %560
  %562 = vrot.lane.b32.xlu0 %v400, 24
  %v563 = vpop.permute.xlu0 %562
  %564 = vrot.lane.b32.xlu0 %v401, 24
  %v565 = vpop.permute.xlu0 %564
  %566 = vrot.lane.b32.xlu0 %v402, 24
  %v567 = vpop.permute.xlu0 %566
  %568 = vrot.lane.b32.xlu0 %v403, 24
  %v569 = vpop.permute.xlu0 %568
  %570 = vrot.lane.b32.xlu0 %v404, 24
  %v571 = vpop.permute.xlu0 %570
  %572 = vrot.lane.b32.xlu0 %v405, 24
  %v573 = vpop.permute.xlu0 %572
  %574 = vrot.lane.b32.xlu0 %v406, 24
  %v575 = vpop.permute.xlu0 %574
  %576 = vrot.lane.b32.xlu0 %v407, 24
  %v577 = vpop.permute.xlu0 %576
  %578 = vrot.lane.b32.xlu0 %v408, 24
  %v579 = vpop.permute.xlu0 %578
  %580 = vrot.lane.b32.xlu0 %v409, 24
  %v581 = vpop.permute.xlu0 %580
  %582 = vrot.lane.b32.xlu0 %v410, 24
  %v583 = vpop.permute.xlu0 %582
  %584 = vrot.lane.b32.xlu0 %v411, 24
  %v585 = vpop.permute.xlu0 %584
  %586 = vrot.lane.b32.xlu0 %v412, 24
  %v587 = vpop.permute.xlu0 %586
  %588 = vrot.lane.b32.xlu0 %v413, 24
  %v589 = vpop.permute.xlu0 %588
  %v606 = vsel %vm294, %v349, %v431
  %v607 = vsel %vm294, %v350, %v433
  %v608 = vsel %vm294, %v351, %v435
  %v609 = vsel %vm294, %v352, %v437
  %v610 = vsel %vm294, %v353, %v439
  %v611 = vsel %vm294, %v354, %v441
  %v612 = vsel %vm294, %v355, %v443
  %v613 = vsel %vm294, %v356, %v445
  %v614 = vsel %vm294, %v357, %v447
  %v615 = vsel %vm294, %v358, %v449
  %v616 = vsel %vm294, %v359, %v451
  %v617 = vsel %vm294, %v360, %v453
  %v618 = vsel %vm294, %v361, %v455
  %v619 = vsel %vm294, %v362, %v457
  %v620 = vsel %vm294, %v363, %v459
  %v621 = vsel %vm294, %v364, %v461
  %vm622 = vcmask 130048
  %v623 = vsel %vm622, %v606, %v495
  %v624 = vsel %vm622, %v607, %v497
  %v625 = vsel %vm622, %v608, %v499
  %v626 = vsel %vm622, %v609, %v501
  %v627 = vsel %vm622, %v610, %v503
  %v628 = vsel %vm622, %v611, %v505
  %v629 = vsel %vm622, %v612, %v507
  %v630 = vsel %vm622, %v613, %v509
  %v631 = vsel %vm622, %v614, %v511
  %v632 = vsel %vm622, %v615, %v513
  %v633 = vsel %vm622, %v616, %v515
  %v634 = vsel %vm622, %v617, %v517
  %v635 = vsel %vm622, %v618, %v519
  %v636 = vsel %vm622, %v619, %v521
  %v637 = vsel %vm622, %v620, %v523
  %v638 = vsel %vm622, %v621, %v525
  %vm639 = vcmask 195584
  %v640 = vsel %vm639, %v623, %v559
  %v641 = vsel %vm639, %v624, %v561
  %v642 = vsel %vm639, %v625, %v563
  %v643 = vsel %vm639, %v626, %v565
  %v644 = vsel %vm639, %v627, %v567
  %v645 = vsel %vm639, %v628, %v569
  %v646 = vsel %vm639, %v629, %v571
  %v647 = vsel %vm639, %v630, %v573
  %v648 = vsel %vm639, %v631, %v575
  %v649 = vsel %vm639, %v632, %v577
  %v650 = vsel %vm639, %v633, %v579
  %v651 = vsel %vm639, %v634, %v581
  %v652 = vsel %vm639, %v635, %v583
  %v653 = vsel %vm639, %v636, %v585
  %v654 = vsel %vm639, %v637, %v587
  %v655 = vsel %vm639, %v638, %v589
  %v656 = vld [vmem:[%s3] sm:$0xff]
  %v657 = vld [vmem:[%s3 + $0x8] sm:$0xff]
  %v658 = vld [vmem:[%s3 + $0x10] sm:$0xff]
  %v659 = vld [vmem:[%s3 + $0x18] sm:$0xff]
  %v661 = vlaneseq
  %v662 = vshrl.u32 %v661, 7
  %v663 = vsub.s32 0, %v662
  %v664 = vrot.slane %v348, %v663
  %vm666 = vcmask 261120
  %v668 = vsel %vm666, %v640, 0
  %v671 = vsel %vm666, %v641, 0
  %v674 = vsel %vm666, %v642, 0
  %v677 = vsel %vm666, %v643, 0
  %v680 = vsel %vm666, %v644, 0
  %v683 = vsel %vm666, %v645, 0
  %v686 = vsel %vm666, %v646, 0
  %v689 = vsel %vm666, %v647, 0
  %v692 = vsel %vm666, %v648, 0
  %v695 = vsel %vm666, %v649, 0
  %v698 = vsel %vm666, %v650, 0
  %v701 = vsel %vm666, %v651, 0
  %v704 = vsel %vm666, %v652, 0
  %v707 = vsel %vm666, %v653, 0
  %v710 = vsel %vm666, %v654, 0
  %v713 = vsel %vm666, %v655, 0
  %715 = vmatprep.subr.mxu0 0.0
  %716 = vmatpush1.msra.mxu0 %v656
  %717 = vmatprep.subr.mxu0 0.0
  %718 = vmatpush1.msra.mxu0 %v657
  %719 = vmatprep.subr.mxu0 0.0
  %720 = vmatpush1.msra.mxu0 %v658
  %721 = vmatprep.subr.mxu0 0.0
  %722 = vmatpush1.msra.mxu0 %v659
  %723 = vmatprep.subr.mxu0 0.0
  %724 = vmatpush1.msra.mxu0 0.0
  %725 = vmatprep.subr.mxu0 0.0
  %726 = vmatpush1.msra.mxu0 0.0
  %727 = vmatprep.subr.mxu0 0.0
  %728 = vmatpush1.msra.mxu0 0.0
  %729 = vmatprep.subr.mxu0 0.0
  %730 = vmatpush1.msra.mxu0 0.0
  %731 = vmatprep.subr.mxu0 0.0
  %732 = vmatpush1.msra.mxu0 0.0
  %733 = vmatprep.subr.mxu0 0.0
  %734 = vmatpush1.msra.mxu0 0.0
  %735 = vmatprep.subr.mxu0 0.0
  %736 = vmatpush1.msra.mxu0 0.0
  %737 = vmatprep.subr.mxu0 0.0
  %738 = vmatpush1.msra.mxu0 0.0
  %739 = vmatprep.subr.mxu0 0.0
  %740 = vmatpush1.msra.mxu0 0.0
  %741 = vmatprep.subr.mxu0 0.0
  %742 = vmatpush1.msra.mxu0 0.0
  %743 = vmatprep.subr.mxu0 0.0
  %744 = vmatpush1.msra.mxu0 0.0
  %745 = vmatprep.subr.mxu0 0.0
  %746 = vmatpush1.msra.mxu0 0.0
  %747 = vmatprep.subr.mxu0 0.0
  %748 = vmatpush1.msra.mxu0 0.0
  %749 = vmatprep.subr.mxu0 0.0
  %750 = vmatpush1.msra.mxu0 0.0
  %751 = vmatprep.subr.mxu0 0.0
  %752 = vmatpush1.msra.mxu0 0.0
  %753 = vmatprep.subr.mxu0 0.0
  %754 = vmatpush1.msra.mxu0 0.0
  %755 = vmatprep.subr.mxu0 0.0
  %756 = vmatpush1.msra.mxu0 0.0
  %757 = vmatprep.subr.mxu0 0.0
  %758 = vmatpush1.msra.mxu0 0.0
  %759 = vmatprep.subr.mxu0 0.0
  %760 = vmatpush1.msra.mxu0 0.0
  %761 = vmatprep.subr.mxu0 0.0
  %762 = vmatpush1.msra.mxu0 0.0
  %763 = vmatprep.subr.mxu0 0.0
  %764 = vmatpush1.msra.mxu0 0.0
  %765 = vmatprep.subr.mxu0 0.0
  %766 = vmatpush1.msra.mxu0 0.0
  %767 = vmatprep.subr.mxu0 0.0
  %768 = vmatpush1.msra.mxu0 0.0
  %769 = vmatprep.subr.mxu0 0.0
  %770 = vmatpush1.msra.mxu0 0.0
  %771 = vmatprep.subr.mxu0 0.0
  %772 = vmatpush1.msra.mxu0 0.0
  %773 = vmatprep.subr.mxu0 0.0
  %774 = vmatpush1.msra.mxu0 0.0
  %775 = vmatprep.subr.mxu0 0.0
  %776 = vmatpush1.msra.mxu0 0.0
  %777 = vmatprep.subr.mxu0 0.0
  %778 = vmatpush1.msra.mxu0 0.0
  %779 = vmatprep.mubr.f32.mxu0 0.0
  %780 = vmatmul.mubr.f32.gmra.mrb[0].mxu0 %v668
  %v781 = vpop.f32.mrb[0].mxu0
  %v782 = vadd.f32 %v664, %v781
  %v783 = vpop.f32.mrb[0].mxu0
  %784 = vmatprep.mubr.f32.mxu0 0.0
  %785 = vmatmul.mubr.f32.gmra.mrb[0].mxu0 %v671
  %v786 = vpop.f32.mrb[0].mxu0
  %v787 = vadd.f32 %v664, %v786
  %v788 = vpop.f32.mrb[0].mxu0
  %789 = vmatprep.mubr.f32.mxu0 0.0
  %790 = vmatmul.mubr.f32.gmra.mrb[0].mxu0 %v674
  %v791 = vpop.f32.mrb[0].mxu0
  %v792 = vadd.f32 %v664, %v791
  %v793 = vpop.f32.mrb[0].mxu0
  %794 = vmatprep.mubr.f32.mxu0 0.0
  %795 = vmatmul.mubr.f32.gmra.mrb[0].mxu0 %v677
  %v796 = vpop.f32.mrb[0].mxu0
  %v797 = vadd.f32 %v664, %v796
  %v798 = vpop.f32.mrb[0].mxu0
  %799 = vmatprep.mubr.f32.mxu0 0.0
  %800 = vmatmul.mubr.f32.gmra.mrb[0].mxu0 %v680
  %v801 = vpop.f32.mrb[0].mxu0
  %v802 = vadd.f32 %v664, %v801
  %v803 = vpop.f32.mrb[0].mxu0
  %804 = vmatprep.mubr.f32.mxu0 0.0
  %805 = vmatmul.mubr.f32.gmra.mrb[0].mxu0 %v683
  %v806 = vpop.f32.mrb[0].mxu0
  %v807 = vadd.f32 %v664, %v806
  %v808 = vpop.f32.mrb[0].mxu0
  %809 = vmatprep.mubr.f32.mxu0 0.0
  %810 = vmatmul.mubr.f32.gmra.mrb[0].mxu0 %v686
  %v811 = vpop.f32.mrb[0].mxu0
  %v812 = vadd.f32 %v664, %v811
  %v813 = vpop.f32.mrb[0].mxu0
  %814 = vmatprep.mubr.f32.mxu0 0.0
  %815 = vmatmul.mubr.f32.gmra.mrb[0].mxu0 %v689
  %v816 = vpop.f32.mrb[0].mxu0
  %v817 = vadd.f32 %v664, %v816
  %v818 = vpop.f32.mrb[0].mxu0
  %819 = vmatprep.mubr.f32.mxu0 0.0
  %820 = vmatmul.mubr.f32.gmra.mrb[0].mxu0 %v692
  %v821 = vpop.f32.mrb[0].mxu0
  %v822 = vadd.f32 %v664, %v821
  %v823 = vpop.f32.mrb[0].mxu0
  %824 = vmatprep.mubr.f32.mxu0 0.0
  %825 = vmatmul.mubr.f32.gmra.mrb[0].mxu0 %v695
  %v826 = vpop.f32.mrb[0].mxu0
  %v827 = vadd.f32 %v664, %v826
  %v828 = vpop.f32.mrb[0].mxu0
  %829 = vmatprep.mubr.f32.mxu0 0.0
  %830 = vmatmul.mubr.f32.gmra.mrb[0].mxu0 %v698
  %v831 = vpop.f32.mrb[0].mxu0
  %v832 = vadd.f32 %v664, %v831
  %v833 = vpop.f32.mrb[0].mxu0
  %834 = vmatprep.mubr.f32.mxu0 0.0
  %835 = vmatmul.mubr.f32.gmra.mrb[0].mxu0 %v701
  %v836 = vpop.f32.mrb[0].mxu0
  %v837 = vadd.f32 %v664, %v836
  %v838 = vpop.f32.mrb[0].mxu0
  %839 = vmatprep.mubr.f32.mxu0 0.0
  %840 = vmatmul.mubr.f32.gmra.mrb[0].mxu0 %v704
  %v841 = vpop.f32.mrb[0].mxu0
  %v842 = vadd.f32 %v664, %v841
  %v843 = vpop.f32.mrb[0].mxu0
  %844 = vmatprep.mubr.f32.mxu0 0.0
  %845 = vmatmul.mubr.f32.gmra.mrb[0].mxu0 %v707
  %v846 = vpop.f32.mrb[0].mxu0
  %v847 = vadd.f32 %v664, %v846
  %v848 = vpop.f32.mrb[0].mxu0
  %849 = vmatprep.mubr.f32.mxu0 0.0
  %850 = vmatmul.mubr.f32.gmra.mrb[0].mxu0 %v710
  %v851 = vpop.f32.mrb[0].mxu0
  %v852 = vadd.f32 %v664, %v851
  %v853 = vpop.f32.mrb[0].mxu0
  %854 = vmatprep.mubr.f32.mxu0 0.0
  %855 = vmatmul.mubr.f32.gmra.mrb[0].mxu0 %v713
  %v856 = vpop.f32.mrb[0].mxu0
  %v857 = vadd.f32 %v664, %v856
  %v858 = vpop.f32.mrb[0].mxu0
  %859 = vdwg.mxu0
  %860 = vst.msk [vmem:[%s5] sm:$0xff] %vm294, %v782
  %861 = vst.msk [vmem:[%s5 + $0x8] sm:$0xff] %vm294, %v787
  %862 = vst.msk [vmem:[%s5 + $0x10] sm:$0xff] %vm294, %v792
  %863 = vst.msk [vmem:[%s5 + $0x18] sm:$0xff] %vm294, %v797
  %864 = vst.msk [vmem:[%s5 + $0x20] sm:$0xff] %vm294, %v802
  %865 = vst.msk [vmem:[%s5 + $0x28] sm:$0xff] %vm294, %v807
  %866 = vst.msk [vmem:[%s5 + $0x30] sm:$0xff] %vm294, %v812
  %867 = vst.msk [vmem:[%s5 + $0x38] sm:$0xff] %vm294, %v817
  %868 = vst.msk [vmem:[%s5 + $0x40] sm:$0xff] %vm294, %v822
  %869 = vst.msk [vmem:[%s5 + $0x48] sm:$0xff] %vm294, %v827
  %870 = vst.msk [vmem:[%s5 + $0x50] sm:$0xff] %vm294, %v832
  %871 = vst.msk [vmem:[%s5 + $0x58] sm:$0xff] %vm294, %v837
  %872 = vst.msk [vmem:[%s5 + $0x60] sm:$0xff] %vm294, %v842
  %873 = vst.msk [vmem:[%s5 + $0x68] sm:$0xff] %vm294, %v847
  %874 = vst.msk [vmem:[%s5 + $0x70] sm:$0xff] %vm294, %v852
  %875 = vst.msk [vmem:[%s5 + $0x78] sm:$0xff] %vm294, %v857
  %v876 = vld [vmem:[#allocation2] sm:$0xff]
  %v877 = vld [vmem:[#allocation2 + $0x10] sm:$0xff]
  %v878 = vld [vmem:[#allocation2 + $0x20] sm:$0xff]
  %v879 = vld [vmem:[#allocation2 + $0x30] sm:$0xff]
  %v880 = vld [vmem:[#allocation2 + $0x40] sm:$0xff]
  %v881 = vld [vmem:[#allocation2 + $0x50] sm:$0xff]
  %v882 = vld [vmem:[#allocation2 + $0x60] sm:$0xff]
  %v883 = vld [vmem:[#allocation2 + $0x70] sm:$0xff]
  %v884 = vld [vmem:[#allocation2 + $0x90] sm:$0xff]
  %v885 = vld [vmem:[#allocation2 + $0xa0] sm:$0xff]
  %v886 = vld [vmem:[#allocation2 + $0xb0] sm:$0xff]
  %v887 = vld [vmem:[#allocation2 + $0xc0] sm:$0xff]
  %v888 = vld [vmem:[#allocation2 + $0xd0] sm:$0xff]
  %v889 = vld [vmem:[#allocation2 + $0xe0] sm:$0xff]
  %v890 = vld [vmem:[#allocation2 + $0xf0] sm:$0xff]
  %v891 = vld [vmem:[#allocation2 + $0x100] sm:$0xff]
  %v892 = vld [vmem:[#allocation2 + $0x1] sm:$0xff]
  %v893 = vld [vmem:[#allocation2 + $0x11] sm:$0xff]
  %v894 = vld [vmem:[#allocation2 + $0x21] sm:$0xff]
  %v895 = vld [vmem:[#allocation2 + $0x31] sm:$0xff]
  %v896 = vld [vmem:[#allocation2 + $0x41] sm:$0xff]
  %v897 = vld [vmem:[#allocation2 + $0x51] sm:$0xff]
  %v898 = vld [vmem:[#allocation2 + $0x61] sm:$0xff]
  %v899 = vld [vmem:[#allocation2 + $0x71] sm:$0xff]
  %v900 = vld [vmem:[#allocation2 + $0x91] sm:$0xff]
  %v901 = vld [vmem:[#allocation2 + $0xa1] sm:$0xff]
  %v902 = vld [vmem:[#allocation2 + $0xb1] sm:$0xff]
  %v903 = vld [vmem:[#allocation2 + $0xc1] sm:$0xff]
  %v904 = vld [vmem:[#allocation2 + $0xd1] sm:$0xff]
  %v905 = vld [vmem:[#allocation2 + $0xe1] sm:$0xff]
  %v906 = vld [vmem:[#allocation2 + $0xf1] sm:$0xff]
  %v907 = vld [vmem:[#allocation2 + $0x101] sm:$0xff]
  %v908 = vld [vmem:[%s381] sm:$0xff]
  %v909 = vld [vmem:[%s381 + $0x10] sm:$0xff]
  %v910 = vld [vmem:[%s381 + $0x20] sm:$0xff]
  %v911 = vld [vmem:[%s381 + $0x30] sm:$0xff]
  %v912 = vld [vmem:[%s381 + $0x40] sm:$0xff]
  %v913 = vld [vmem:[%s381 + $0x50] sm:$0xff]
  %v914 = vld [vmem:[%s381 + $0x60] sm:$0xff]
  %v915 = vld [vmem:[%s381 + $0x70] sm:$0xff]
  %v916 = vld [vmem:[%s381 + $0x90] sm:$0xff]
  %v917 = vld [vmem:[%s381 + $0xa0] sm:$0xff]
  %v918 = vld [vmem:[%s381 + $0xb0] sm:$0xff]
  %v919 = vld [vmem:[%s381 + $0xc0] sm:$0xff]
  %v920 = vld [vmem:[%s381 + $0xd0] sm:$0xff]
  %v921 = vld [vmem:[%s381 + $0xe0] sm:$0xff]
  %v922 = vld [vmem:[%s381 + $0xf0] sm:$0xff]
  %v923 = vld [vmem:[%s381 + $0x100] sm:$0xff]
  %v924 = vld [vmem:[%s381 + $0x1] sm:$0xff]
  %v925 = vld [vmem:[%s381 + $0x11] sm:$0xff]
  %v926 = vld [vmem:[%s381 + $0x21] sm:$0xff]
  %v927 = vld [vmem:[%s381 + $0x31] sm:$0xff]
  %v928 = vld [vmem:[%s381 + $0x41] sm:$0xff]
  %v929 = vld [vmem:[%s381 + $0x51] sm:$0xff]
  %v930 = vld [vmem:[%s381 + $0x61] sm:$0xff]
  %v931 = vld [vmem:[%s381 + $0x71] sm:$0xff]
  %v932 = vld [vmem:[%s381 + $0x91] sm:$0xff]
  %v933 = vld [vmem:[%s381 + $0xa1] sm:$0xff]
  %v934 = vld [vmem:[%s381 + $0xb1] sm:$0xff]
  %v935 = vld [vmem:[%s381 + $0xc1] sm:$0xff]
  %v936 = vld [vmem:[%s381 + $0xd1] sm:$0xff]
  %v937 = vld [vmem:[%s381 + $0xe1] sm:$0xff]
  %v938 = vld [vmem:[%s381 + $0xf1] sm:$0xff]
  %v939 = vld [vmem:[%s381 + $0x101] sm:$0xff]
  %956 = vrot.lane.b32.xlu0 %v892, 8
  %v957 = vpop.permute.xlu0 %956
  %958 = vrot.lane.b32.xlu0 %v893, 8
  %v959 = vpop.permute.xlu0 %958
  %960 = vrot.lane.b32.xlu0 %v894, 8
  %v961 = vpop.permute.xlu0 %960
  %962 = vrot.lane.b32.xlu0 %v895, 8
  %v963 = vpop.permute.xlu0 %962
  %964 = vrot.lane.b32.xlu0 %v896, 8
  %v965 = vpop.permute.xlu0 %964
  %966 = vrot.lane.b32.xlu0 %v897, 8
  %v967 = vpop.permute.xlu0 %966
  %968 = vrot.lane.b32.xlu0 %v898, 8
  %v969 = vpop.permute.xlu0 %968
  %970 = vrot.lane.b32.xlu0 %v899, 8
  %v971 = vpop.permute.xlu0 %970
  %972 = vrot.lane.b32.xlu0 %v900, 8
  %v973 = vpop.permute.xlu0 %972
  %974 = vrot.lane.b32.xlu0 %v901, 8
  %v975 = vpop.permute.xlu0 %974
  %976 = vrot.lane.b32.xlu0 %v902, 8
  %v977 = vpop.permute.xlu0 %976
  %978 = vrot.lane.b32.xlu0 %v903, 8
  %v979 = vpop.permute.xlu0 %978
  %980 = vrot.lane.b32.xlu0 %v904, 8
  %v981 = vpop.permute.xlu0 %980
  %982 = vrot.lane.b32.xlu0 %v905, 8
  %v983 = vpop.permute.xlu0 %982
  %984 = vrot.lane.b32.xlu0 %v906, 8
  %v985 = vpop.permute.xlu0 %984
  %986 = vrot.lane.b32.xlu0 %v907, 8
  %v987 = vpop.permute.xlu0 %986
  %1020 = vrot.lane.b32.xlu0 %v908, 16
  %v1021 = vpop.permute.xlu0 %1020
  %1022 = vrot.lane.b32.xlu0 %v909, 16
  %v1023 = vpop.permute.xlu0 %1022
  %1024 = vrot.lane.b32.xlu0 %v910, 16
  %v1025 = vpop.permute.xlu0 %1024
  %1026 = vrot.lane.b32.xlu0 %v911, 16
  %v1027 = vpop.permute.xlu0 %1026
  %1028 = vrot.lane.b32.xlu0 %v912, 16
  %v1029 = vpop.permute.xlu0 %1028
  %1030 = vrot.lane.b32.xlu0 %v913, 16
  %v1031 = vpop.permute.xlu0 %1030
  %1032 = vrot.lane.b32.xlu0 %v914, 16
  %v1033 = vpop.permute.xlu0 %1032
  %1034 = vrot.lane.b32.xlu0 %v915, 16
  %v1035 = vpop.permute.xlu0 %1034
  %1036 = vrot.lane.b32.xlu0 %v916, 16
  %v1037 = vpop.permute.xlu0 %1036
  %1038 = vrot.lane.b32.xlu0 %v917, 16
  %v1039 = vpop.permute.xlu0 %1038
  %1040 = vrot.lane.b32.xlu0 %v918, 16
  %v1041 = vpop.permute.xlu0 %1040
  %1042 = vrot.lane.b32.xlu0 %v919, 16
  %v1043 = vpop.permute.xlu0 %1042
  %1044 = vrot.lane.b32.xlu0 %v920, 16
  %v1045 = vpop.permute.xlu0 %1044
  %1046 = vrot.lane.b32.xlu0 %v921, 16
  %v1047 = vpop.permute.xlu0 %1046
  %1048 = vrot.lane.b32.xlu0 %v922, 16
  %v1049 = vpop.permute.xlu0 %1048
  %1050 = vrot.lane.b32.xlu0 %v923, 16
  %v1051 = vpop.permute.xlu0 %1050
  %1084 = vrot.lane.b32.xlu0 %v924, 24
  %v1085 = vpop.permute.xlu0 %1084
  %1086 = vrot.lane.b32.xlu0 %v925, 24
  %v1087 = vpop.permute.xlu0 %1086
  %1088 = vrot.lane.b32.xlu0 %v926, 24
  %v1089 = vpop.permute.xlu0 %1088
  %1090 = vrot.lane.b32.xlu0 %v927, 24
  %v1091 = vpop.permute.xlu0 %1090
  %1092 = vrot.lane.b32.xlu0 %v928, 24
  %v1093 = vpop.permute.xlu0 %1092
  %1094 = vrot.lane.b32.xlu0 %v929, 24
  %v1095 = vpop.permute.xlu0 %1094
  %1096 = vrot.lane.b32.xlu0 %v930, 24
  %v1097 = vpop.permute.xlu0 %1096
  %1098 = vrot.lane.b32.xlu0 %v931, 24
  %v1099 = vpop.permute.xlu0 %1098
  %1100 = vrot.lane.b32.xlu0 %v932, 24
  %v1101 = vpop.permute.xlu0 %1100
  %1102 = vrot.lane.b32.xlu0 %v933, 24
  %v1103 = vpop.permute.xlu0 %1102
  %1104 = vrot.lane.b32.xlu0 %v934, 24
  %v1105 = vpop.permute.xlu0 %1104
  %1106 = vrot.lane.b32.xlu0 %v935, 24
  %v1107 = vpop.permute.xlu0 %1106
  %1108 = vrot.lane.b32.xlu0 %v936, 24
  %v1109 = vpop.permute.xlu0 %1108
  %1110 = vrot.lane.b32.xlu0 %v937, 24
  %v1111 = vpop.permute.xlu0 %1110
  %1112 = vrot.lane.b32.xlu0 %v938, 24
  %v1113 = vpop.permute.xlu0 %1112
  %1114 = vrot.lane.b32.xlu0 %v939, 24
  %v1115 = vpop.permute.xlu0 %1114
  %v1132 = vsel %vm294, %v876, %v957
  %v1133 = vsel %vm294, %v877, %v959
  %v1134 = vsel %vm294, %v878, %v961
  %v1135 = vsel %vm294, %v879, %v963
  %v1136 = vsel %vm294, %v880, %v965
  %v1137 = vsel %vm294, %v881, %v967
  %v1138 = vsel %vm294, %v882, %v969
  %v1139 = vsel %vm294, %v883, %v971
  %v1140 = vsel %vm294, %v884, %v973
  %v1141 = vsel %vm294, %v885, %v975
  %v1142 = vsel %vm294, %v886, %v977
  %v1143 = vsel %vm294, %v887, %v979
  %v1144 = vsel %vm294, %v888, %v981
  %v1145 = vsel %vm294, %v889, %v983
  %v1146 = vsel %vm294, %v890, %v985
  %v1147 = vsel %vm294, %v891, %v987
  %v1148 = vsel %vm622, %v1132, %v1021
  %v1149 = vsel %vm622, %v1133, %v1023
  %v1150 = vsel %vm622, %v1134, %v1025
  %v1151 = vsel %vm622, %v1135, %v1027
  %v1152 = vsel %vm622, %v1136, %v1029
  %v1153 = vsel %vm622, %v1137, %v1031
  %v1154 = vsel %vm622, %v1138, %v1033
  %v1155 = vsel %vm622, %v1139, %v1035
  %v1156 = vsel %vm622, %v1140, %v1037
  %v1157 = vsel %vm622, %v1141, %v1039
  %v1158 = vsel %vm622, %v1142, %v1041
  %v1159 = vsel %vm622, %v1143, %v1043
  %v1160 = vsel %vm622, %v1144, %v1045
  %v1161 = vsel %vm622, %v1145, %v1047
  %v1162 = vsel %vm622, %v1146, %v1049
  %v1163 = vsel %vm622, %v1147, %v1051
  %v1164 = vsel %vm639, %v1148, %v1085
  %v1165 = vsel %vm639, %v1149, %v1087
  %v1166 = vsel %vm639, %v1150, %v1089
  %v1167 = vsel %vm639, %v1151, %v1091
  %v1168 = vsel %vm639, %v1152, %v1093
  %v1169 = vsel %vm639, %v1153, %v1095
  %v1170 = vsel %vm639, %v1154, %v1097
  %v1171 = vsel %vm639, %v1155, %v1099
  %v1172 = vsel %vm639, %v1156, %v1101
  %v1173 = vsel %vm639, %v1157, %v1103
  %v1174 = vsel %vm639, %v1158, %v1105
  %v1175 = vsel %vm639, %v1159, %v1107
  %v1176 = vsel %vm639, %v1160, %v1109
  %v1177 = vsel %vm639, %v1161, %v1111
  %v1178 = vsel %vm639, %v1162, %v1113
  %v1179 = vsel %vm639, %v1163, %v1115
  %s1180 = scalar_lea.vmem %s3, 32
  %v1181 = vld [vmem:[%s1180] sm:$0xff]
  %v1182 = vld [vmem:[%s1180 + $0x8] sm:$0xff]
  %v1183 = vld [vmem:[%s1180 + $0x10] sm:$0xff]
  %v1184 = vld [vmem:[%s1180 + $0x18] sm:$0xff]
  %v1186 = vsel %vm666, %v1164, 0
  %v1189 = vsel %vm666, %v1165, 0
  %v1192 = vsel %vm666, %v1166, 0
  %v1195 = vsel %vm666, %v1167, 0
  %v1198 = vsel %vm666, %v1168, 0
  %v1201 = vsel %vm666, %v1169, 0
  %v1204 = vsel %vm666, %v1170, 0
  %v1207 = vsel %vm666, %v1171, 0
  %v1210 = vsel %vm666, %v1172, 0
  %v1213 = vsel %vm666, %v1173, 0
  %v1216 = vsel %vm666, %v1174, 0
  %v1219 = vsel %vm666, %v1175, 0
  %v1222 = vsel %vm666, %v1176, 0
  %v1225 = vsel %vm666, %v1177, 0
  %v1228 = vsel %vm666, %v1178, 0
  %v1231 = vsel %vm666, %v1179, 0
  %1233 = vmatprep.subr.mxu0 0.0
  %1234 = vmatpush1.msra.mxu0 %v1181
  %1235 = vmatprep.subr.mxu0 0.0
  %1236 = vmatpush1.msra.mxu0 %v1182
  %1237 = vmatprep.subr.mxu0 0.0
  %1238 = vmatpush1.msra.mxu0 %v1183
  %1239 = vmatprep.subr.mxu0 0.0
  %1240 = vmatpush1.msra.mxu0 %v1184
  %1241 = vmatprep.subr.mxu0 0.0
  %1242 = vmatpush1.msra.mxu0 0.0
  %1243 = vmatprep.subr.mxu0 0.0
  %1244 = vmatpush1.msra.mxu0 0.0
  %1245 = vmatprep.subr.mxu0 0.0
  %1246 = vmatpush1.msra.mxu0 0.0
  %1247 = vmatprep.subr.mxu0 0.0
  %1248 = vmatpush1.msra.mxu0 0.0
  %1249 = vmatprep.subr.mxu0 0.0
  %1250 = vmatpush1.msra.mxu0 0.0
  %1251 = vmatprep.subr.mxu0 0.0
  %1252 = vmatpush1.msra.mxu0 0.0
  %1253 = vmatprep.subr.mxu0 0.0
  %1254 = vmatpush1.msra.mxu0 0.0
  %1255 = vmatprep.subr.mxu0 0.0
  %1256 = vmatpush1.msra.mxu0 0.0
  %1257 = vmatprep.subr.mxu0 0.0
  %1258 = vmatpush1.msra.mxu0 0.0
  %1259 = vmatprep.subr.mxu0 0.0
  %1260 = vmatpush1.msra.mxu0 0.0
  %1261 = vmatprep.subr.mxu0 0.0
  %1262 = vmatpush1.msra.mxu0 0.0
  %1263 = vmatprep.subr.mxu0 0.0
  %1264 = vmatpush1.msra.mxu0 0.0
  %1265 = vmatprep.subr.mxu0 0.0
  %1266 = vmatpush1.msra.mxu0 0.0
  %1267 = vmatprep.subr.mxu0 0.0
  %1268 = vmatpush1.msra.mxu0 0.0
  %1269 = vmatprep.subr.mxu0 0.0
  %1270 = vmatpush1.msra.mxu0 0.0
  %1271 = vmatprep.subr.mxu0 0.0
  %1272 = vmatpush1.msra.mxu0 0.0
  %1273 = vmatprep.subr.mxu0 0.0
  %1274 = vmatpush1.msra.mxu0 0.0
  %1275 = vmatprep.subr.mxu0 0.0
  %1276 = vmatpush1.msra.mxu0 0.0
  %1277 = vmatprep.subr.mxu0 0.0
  %1278 = vmatpush1.msra.mxu0 0.0
  %1279 = vmatprep.subr.mxu0 0.0
  %1280 = vmatpush1.msra.mxu0 0.0
  %1281 = vmatprep.subr.mxu0 0.0
  %1282 = vmatpush1.msra.mxu0 0.0
  %1283 = vmatprep.subr.mxu0 0.0
  %1284 = vmatpush1.msra.mxu0 0.0
  %1285 = vmatprep.subr.mxu0 0.0
  %1286 = vmatpush1.msra.mxu0 0.0
  %1287 = vmatprep.subr.mxu0 0.0
  %1288 = vmatpush1.msra.mxu0 0.0
  %1289 = vmatprep.subr.mxu0 0.0
  %1290 = vmatpush1.msra.mxu0 0.0
  %1291 = vmatprep.subr.mxu0 0.0
  %1292 = vmatpush1.msra.mxu0 0.0
  %1293 = vmatprep.subr.mxu0 0.0
  %1294 = vmatpush1.msra.mxu0 0.0
  %1295 = vmatprep.subr.mxu0 0.0
  %1296 = vmatpush1.msra.mxu0 0.0
  %1297 = vmatprep.mubr.f32.mxu0 0.0
  %1298 = vmatmul.mubr.f32.gmra.mrb[0].mxu0 %v1186
  %v1299 = vpop.f32.mrb[0].mxu0
  %v1300 = vadd.f32 %v664, %v1299
  %v1301 = vpop.f32.mrb[0].mxu0
  %1302 = vmatprep.mubr.f32.mxu0 0.0
  %1303 = vmatmul.mubr.f32.gmra.mrb[0].mxu0 %v1189
  %v1304 = vpop.f32.mrb[0].mxu0
  %v1305 = vadd.f32 %v664, %v1304
  %v1306 = vpop.f32.mrb[0].mxu0
  %1307 = vmatprep.mubr.f32.mxu0 0.0
  %1308 = vmatmul.mubr.f32.gmra.mrb[0].mxu0 %v1192
  %v1309 = vpop.f32.mrb[0].mxu0
  %v1310 = vadd.f32 %v664, %v1309
  %v1311 = vpop.f32.mrb[0].mxu0
  %1312 = vmatprep.mubr.f32.mxu0 0.0
  %1313 = vmatmul.mubr.f32.gmra.mrb[0].mxu0 %v1195
  %v1314 = vpop.f32.mrb[0].mxu0
  %v1315 = vadd.f32 %v664, %v1314
  %v1316 = vpop.f32.mrb[0].mxu0
  %1317 = vmatprep.mubr.f32.mxu0 0.0
  %1318 = vmatmul.mubr.f32.gmra.mrb[0].mxu0 %v1198
  %v1319 = vpop.f32.mrb[0].mxu0
  %v1320 = vadd.f32 %v664, %v1319
  %v1321 = vpop.f32.mrb[0].mxu0
  %1322 = vmatprep.mubr.f32.mxu0 0.0
  %1323 = vmatmul.mubr.f32.gmra.mrb[0].mxu0 %v1201
  %v1324 = vpop.f32.mrb[0].mxu0
  %v1325 = vadd.f32 %v664, %v1324
  %v1326 = vpop.f32.mrb[0].mxu0
  %1327 = vmatprep.mubr.f32.mxu0 0.0
  %1328 = vmatmul.mubr.f32.gmra.mrb[0].mxu0 %v1204
  %v1329 = vpop.f32.mrb[0].mxu0
  %v1330 = vadd.f32 %v664, %v1329
  %v1331 = vpop.f32.mrb[0].mxu0
  %1332 = vmatprep.mubr.f32.mxu0 0.0
  %1333 = vmatmul.mubr.f32.gmra.mrb[0].mxu0 %v1207
  %v1334 = vpop.f32.mrb[0].mxu0
  %v1335 = vadd.f32 %v664, %v1334
  %v1336 = vpop.f32.mrb[0].mxu0
  %1337 = vmatprep.mubr.f32.mxu0 0.0
  %1338 = vmatmul.mubr.f32.gmra.mrb[0].mxu0 %v1210
  %v1339 = vpop.f32.mrb[0].mxu0
  %v1340 = vadd.f32 %v664, %v1339
  %v1341 = vpop.f32.mrb[0].mxu0
  %1342 = vmatprep.mubr.f32.mxu0 0.0
  %1343 = vmatmul.mubr.f32.gmra.mrb[0].mxu0 %v1213
  %v1344 = vpop.f32.mrb[0].mxu0
  %v1345 = vadd.f32 %v664, %v1344
  %v1346 = vpop.f32.mrb[0].mxu0
  %1347 = vmatprep.mubr.f32.mxu0 0.0
  %1348 = vmatmul.mubr.f32.gmra.mrb[0].mxu0 %v1216
  %v1349 = vpop.f32.mrb[0].mxu0
  %v1350 = vadd.f32 %v664, %v1349
  %v1351 = vpop.f32.mrb[0].mxu0
  %1352 = vmatprep.mubr.f32.mxu0 0.0
  %1353 = vmatmul.mubr.f32.gmra.mrb[0].mxu0 %v1219
  %v1354 = vpop.f32.mrb[0].mxu0
  %v1355 = vadd.f32 %v664, %v1354
  %v1356 = vpop.f32.mrb[0].mxu0
  %1357 = vmatprep.mubr.f32.mxu0 0.0
  %1358 = vmatmul.mubr.f32.gmra.mrb[0].mxu0 %v1222
  %v1359 = vpop.f32.mrb[0].mxu0
  %v1360 = vadd.f32 %v664, %v1359
  %v1361 = vpop.f32.mrb[0].mxu0
  %1362 = vmatprep.mubr.f32.mxu0 0.0
  %1363 = vmatmul.mubr.f32.gmra.mrb[0].mxu0 %v1225
  %v1364 = vpop.f32.mrb[0].mxu0
  %v1365 = vadd.f32 %v664, %v1364
  %v1366 = vpop.f32.mrb[0].mxu0
  %1367 = vmatprep.mubr.f32.mxu0 0.0
  %1368 = vmatmul.mubr.f32.gmra.mrb[0].mxu0 %v1228
  %v1369 = vpop.f32.mrb[0].mxu0
  %v1370 = vadd.f32 %v664, %v1369
  %v1371 = vpop.f32.mrb[0].mxu0
  %1372 = vmatprep.mubr.f32.mxu0 0.0
  %1373 = vmatmul.mubr.f32.gmra.mrb[0].mxu0 %v1231
  %v1374 = vpop.f32.mrb[0].mxu0
  %v1375 = vadd.f32 %v664, %v1374
  %v1376 = vpop.f32.mrb[0].mxu0
  %1377 = vdwg.mxu0
  %s1378 = scalar_lea.vmem %s5, 128
  %1379 = vst.msk [vmem:[%s1378] sm:$0xff] %vm294, %v1300
  %1380 = vst.msk [vmem:[%s1378 + $0x8] sm:$0xff] %vm294, %v1305
  %1381 = vst.msk [vmem:[%s1378 + $0x10] sm:$0xff] %vm294, %v1310
  %1382 = vst.msk [vmem:[%s1378 + $0x18] sm:$0xff] %vm294, %v1315
  %1383 = vst.msk [vmem:[%s1378 + $0x20] sm:$0xff] %vm294, %v1320
  %1384 = vst.msk [vmem:[%s1378 + $0x28] sm:$0xff] %vm294, %v1325
  %1385 = vst.msk [vmem:[%s1378 + $0x30] sm:$0xff] %vm294, %v1330
  %1386 = vst.msk [vmem:[%s1378 + $0x38] sm:$0xff] %vm294, %v1335
  %1387 = vst.msk [vmem:[%s1378 + $0x40] sm:$0xff] %vm294, %v1340
  %1388 = vst.msk [vmem:[%s1378 + $0x48] sm:$0xff] %vm294, %v1345
  %1389 = vst.msk [vmem:[%s1378 + $0x50] sm:$0xff] %vm294, %v1350
  %1390 = vst.msk [vmem:[%s1378 + $0x58] sm:$0xff] %vm294, %v1355
  %1391 = vst.msk [vmem:[%s1378 + $0x60] sm:$0xff] %vm294, %v1360
  %1392 = vst.msk [vmem:[%s1378 + $0x68] sm:$0xff] %vm294, %v1365
  %1393 = vst.msk [vmem:[%s1378 + $0x70] sm:$0xff] %vm294, %v1370
  %1394 = vst.msk [vmem:[%s1378 + $0x78] sm:$0xff] %vm294, %v1375
  %v1395 = vld [vmem:[#allocation2] sm:$0xff]
  %v1396 = vld [vmem:[#allocation2 + $0x10] sm:$0xff]
  %v1397 = vld [vmem:[#allocation2 + $0x20] sm:$0xff]
  %v1398 = vld [vmem:[#allocation2 + $0x30] sm:$0xff]
  %v1399 = vld [vmem:[#allocation2 + $0x40] sm:$0xff]
  %v1400 = vld [vmem:[#allocation2 + $0x50] sm:$0xff]
  %v1401 = vld [vmem:[#allocation2 + $0x60] sm:$0xff]
  %v1402 = vld [vmem:[#allocation2 + $0x70] sm:$0xff]
  %v1403 = vld [vmem:[#allocation2 + $0x90] sm:$0xff]
  %v1404 = vld [vmem:[#allocation2 + $0xa0] sm:$0xff]
  %v1405 = vld [vmem:[#allocation2 + $0xb0] sm:$0xff]
  %v1406 = vld [vmem:[#allocation2 + $0xc0] sm:$0xff]
  %v1407 = vld [vmem:[#allocation2 + $0xd0] sm:$0xff]
  %v1408 = vld [vmem:[#allocation2 + $0xe0] sm:$0xff]
  %v1409 = vld [vmem:[#allocation2 + $0xf0] sm:$0xff]
  %v1410 = vld [vmem:[#allocation2 + $0x100] sm:$0xff]
  %v1411 = vld [vmem:[#allocation2 + $0x1] sm:$0xff]
  %v1412 = vld [vmem:[#allocation2 + $0x11] sm:$0xff]
  %v1413 = vld [vmem:[#allocation2 + $0x21] sm:$0xff]
  %v1414 = vld [vmem:[#allocation2 + $0x31] sm:$0xff]
  %v1415 = vld [vmem:[#allocation2 + $0x41] sm:$0xff]
  %v1416 = vld [vmem:[#allocation2 + $0x51] sm:$0xff]
  %v1417 = vld [vmem:[#allocation2 + $0x61] sm:$0xff]
  %v1418 = vld [vmem:[#allocation2 + $0x71] sm:$0xff]
  %v1419 = vld [vmem:[#allocation2 + $0x91] sm:$0xff]
  %v1420 = vld [vmem:[#allocation2 + $0xa1] sm:$0xff]
  %v1421 = vld [vmem:[#allocation2 + $0xb1] sm:$0xff]
  %v1422 = vld [vmem:[#allocation2 + $0xc1] sm:$0xff]
  %v1423 = vld [vmem:[#allocation2 + $0xd1] sm:$0xff]
  %v1424 = vld [vmem:[#allocation2 + $0xe1] sm:$0xff]
  %v1425 = vld [vmem:[#allocation2 + $0xf1] sm:$0xff]
  %v1426 = vld [vmem:[#allocation2 + $0x101] sm:$0xff]
  %v1427 = vld [vmem:[%s381] sm:$0xff]
  %v1428 = vld [vmem:[%s381 + $0x10] sm:$0xff]
  %v1429 = vld [vmem:[%s381 + $0x20] sm:$0xff]
  %v1430 = vld [vmem:[%s381 + $0x30] sm:$0xff]
  %v1431 = vld [vmem:[%s381 + $0x40] sm:$0xff]
  %v1432 = vld [vmem:[%s381 + $0x50] sm:$0xff]
  %v1433 = vld [vmem:[%s381 + $0x60] sm:$0xff]
  %v1434 = vld [vmem:[%s381 + $0x70] sm:$0xff]
  %v1435 = vld [vmem:[%s381 + $0x90] sm:$0xff]
  %v1436 = vld [vmem:[%s381 + $0xa0] sm:$0xff]
  %v1437 = vld [vmem:[%s381 + $0xb0] sm:$0xff]
  %v1438 = vld [vmem:[%s381 + $0xc0] sm:$0xff]
  %v1439 = vld [vmem:[%s381 + $0xd0] sm:$0xff]
  %v1440 = vld [vmem:[%s381 + $0xe0] sm:$0xff]
  %v1441 = vld [vmem:[%s381 + $0xf0] sm:$0xff]
  %v1442 = vld [vmem:[%s381 + $0x100] sm:$0xff]
  %v1443 = vld [vmem:[%s381 + $0x1] sm:$0xff]
  %v1444 = vld [vmem:[%s381 + $0x11] sm:$0xff]
  %v1445 = vld [vmem:[%s381 + $0x21] sm:$0xff]
  %v1446 = vld [vmem:[%s381 + $0x31] sm:$0xff]
  %v1447 = vld [vmem:[%s381 + $0x41] sm:$0xff]
  %v1448 = vld [vmem:[%s381 + $0x51] sm:$0xff]
  %v1449 = vld [vmem:[%s381 + $0x61] sm:$0xff]
  %v1450 = vld [vmem:[%s381 + $0x71] sm:$0xff]
  %v1451 = vld [vmem:[%s381 + $0x91] sm:$0xff]
  %v1452 = vld [vmem:[%s381 + $0xa1] sm:$0xff]
  %v1453 = vld [vmem:[%s381 + $0xb1] sm:$0xff]
  %v1454 = vld [vmem:[%s381 + $0xc1] sm:$0xff]
  %v1455 = vld [vmem:[%s381 + $0xd1] sm:$0xff]
  %v1456 = vld [vmem:[%s381 + $0xe1] sm:$0xff]
  %v1457 = vld [vmem:[%s381 + $0xf1] sm:$0xff]
  %v1458 = vld [vmem:[%s381 + $0x101] sm:$0xff]
  %1475 = vrot.lane.b32.xlu0 %v1411, 8
  %v1476 = vpop.permute.xlu0 %1475
  %1477 = vrot.lane.b32.xlu0 %v1412, 8
  %v1478 = vpop.permute.xlu0 %1477
  %1479 = vrot.lane.b32.xlu0 %v1413, 8
  %v1480 = vpop.permute.xlu0 %1479
  %1481 = vrot.lane.b32.xlu0 %v1414, 8
  %v1482 = vpop.permute.xlu0 %1481
  %1483 = vrot.lane.b32.xlu0 %v1415, 8
  %v1484 = vpop.permute.xlu0 %1483
  %1485 = vrot.lane.b32.xlu0 %v1416, 8
  %v1486 = vpop.permute.xlu0 %1485
  %1487 = vrot.lane.b32.xlu0 %v1417, 8
  %v1488 = vpop.permute.xlu0 %1487
  %1489 = vrot.lane.b32.xlu0 %v1418, 8
  %v1490 = vpop.permute.xlu0 %1489
  %1491 = vrot.lane.b32.xlu0 %v1419, 8
  %v1492 = vpop.permute.xlu0 %1491
  %1493 = vrot.lane.b32.xlu0 %v1420, 8
  %v1494 = vpop.permute.xlu0 %1493
  %1495 = vrot.lane.b32.xlu0 %v1421, 8
  %v1496 = vpop.permute.xlu0 %1495
  %1497 = vrot.lane.b32.xlu0 %v1422, 8
  %v1498 = vpop.permute.xlu0 %1497
  %1499 = vrot.lane.b32.xlu0 %v1423, 8
  %v1500 = vpop.permute.xlu0 %1499
  %1501 = vrot.lane.b32.xlu0 %v1424, 8
  %v1502 = vpop.permute.xlu0 %1501
  %1503 = vrot.lane.b32.xlu0 %v1425, 8
  %v1504 = vpop.permute.xlu0 %1503
  %1505 = vrot.lane.b32.xlu0 %v1426, 8
  %v1506 = vpop.permute.xlu0 %1505
  %1539 = vrot.lane.b32.xlu0 %v1427, 16
  %v1540 = vpop.permute.xlu0 %1539
  %1541 = vrot.lane.b32.xlu0 %v1428, 16
  %v1542 = vpop.permute.xlu0 %1541
  %1543 = vrot.lane.b32.xlu0 %v1429, 16
  %v1544 = vpop.permute.xlu0 %1543
  %1545 = vrot.lane.b32.xlu0 %v1430, 16
  %v1546 = vpop.permute.xlu0 %1545
  %1547 = vrot.lane.b32.xlu0 %v1431, 16
  %v1548 = vpop.permute.xlu0 %1547
  %1549 = vrot.lane.b32.xlu0 %v1432, 16
  %v1550 = vpop.permute.xlu0 %1549
  %1551 = vrot.lane.b32.xlu0 %v1433, 16
  %v1552 = vpop.permute.xlu0 %1551
  %1553 = vrot.lane.b32.xlu0 %v1434, 16
  %v1554 = vpop.permute.xlu0 %1553
  %1555 = vrot.lane.b32.xlu0 %v1435, 16
  %v1556 = vpop.permute.xlu0 %1555
  %1557 = vrot.lane.b32.xlu0 %v1436, 16
  %v1558 = vpop.permute.xlu0 %1557
  %1559 = vrot.lane.b32.xlu0 %v1437, 16
  %v1560 = vpop.permute.xlu0 %1559
  %1561 = vrot.lane.b32.xlu0 %v1438, 16
  %v1562 = vpop.permute.xlu0 %1561
  %1563 = vrot.lane.b32.xlu0 %v1439, 16
  %v1564 = vpop.permute.xlu0 %1563
  %1565 = vrot.lane.b32.xlu0 %v1440, 16
  %v1566 = vpop.permute.xlu0 %1565
  %1567 = vrot.lane.b32.xlu0 %v1441, 16
  %v1568 = vpop.permute.xlu0 %1567
  %1569 = vrot.lane.b32.xlu0 %v1442, 16
  %v1570 = vpop.permute.xlu0 %1569
  %1603 = vrot.lane.b32.xlu0 %v1443, 24
  %v1604 = vpop.permute.xlu0 %1603
  %1605 = vrot.lane.b32.xlu0 %v1444, 24
  %v1606 = vpop.permute.xlu0 %1605
  %1607 = vrot.lane.b32.xlu0 %v1445, 24
  %v1608 = vpop.permute.xlu0 %1607
  %1609 = vrot.lane.b32.xlu0 %v1446, 24
  %v1610 = vpop.permute.xlu0 %1609
  %1611 = vrot.lane.b32.xlu0 %v1447, 24
  %v1612 = vpop.permute.xlu0 %1611
  %1613 = vrot.lane.b32.xlu0 %v1448, 24
  %v1614 = vpop.permute.xlu0 %1613
  %1615 = vrot.lane.b32.xlu0 %v1449, 24
  %v1616 = vpop.permute.xlu0 %1615
  %1617 = vrot.lane.b32.xlu0 %v1450, 24
  %v1618 = vpop.permute.xlu0 %1617
  %1619 = vrot.lane.b32.xlu0 %v1451, 24
  %v1620 = vpop.permute.xlu0 %1619
  %1621 = vrot.lane.b32.xlu0 %v1452, 24
  %v1622 = vpop.permute.xlu0 %1621
  %1623 = vrot.lane.b32.xlu0 %v1453, 24
  %v1624 = vpop.permute.xlu0 %1623
  %1625 = vrot.lane.b32.xlu0 %v1454, 24
  %v1626 = vpop.permute.xlu0 %1625
  %1627 = vrot.lane.b32.xlu0 %v1455, 24
  %v1628 = vpop.permute.xlu0 %1627
  %1629 = vrot.lane.b32.xlu0 %v1456, 24
  %v1630 = vpop.permute.xlu0 %1629
  %1631 = vrot.lane.b32.xlu0 %v1457, 24
  %v1632 = vpop.permute.xlu0 %1631
  %1633 = vrot.lane.b32.xlu0 %v1458, 24
  %v1634 = vpop.permute.xlu0 %1633
  %v1651 = vsel %vm294, %v1395, %v1476
  %v1652 = vsel %vm294, %v1396, %v1478
  %v1653 = vsel %vm294, %v1397, %v1480
  %v1654 = vsel %vm294, %v1398, %v1482
  %v1655 = vsel %vm294, %v1399, %v1484
  %v1656 = vsel %vm294, %v1400, %v1486
  %v1657 = vsel %vm294, %v1401, %v1488
  %v1658 = vsel %vm294, %v1402, %v1490
  %v1659 = vsel %vm294, %v1403, %v1492
  %v1660 = vsel %vm294, %v1404, %v1494
  %v1661 = vsel %vm294, %v1405, %v1496
  %v1662 = vsel %vm294, %v1406, %v1498
  %v1663 = vsel %vm294, %v1407, %v1500
  %v1664 = vsel %vm294, %v1408, %v1502
  %v1665 = vsel %vm294, %v1409, %v1504
  %v1666 = vsel %vm294, %v1410, %v1506
  %v1667 = vsel %vm622, %v1651, %v1540
  %v1668 = vsel %vm622, %v1652, %v1542
  %v1669 = vsel %vm622, %v1653, %v1544
  %v1670 = vsel %vm622, %v1654, %v1546
  %v1671 = vsel %vm622, %v1655, %v1548
  %v1672 = vsel %vm622, %v1656, %v1550
  %v1673 = vsel %vm622, %v1657, %v1552
  %v1674 = vsel %vm622, %v1658, %v1554
  %v1675 = vsel %vm622, %v1659, %v1556
  %v1676 = vsel %vm622, %v1660, %v1558
  %v1677 = vsel %vm622, %v1661, %v1560
  %v1678 = vsel %vm622, %v1662, %v1562
  %v1679 = vsel %vm622, %v1663, %v1564
  %v1680 = vsel %vm622, %v1664, %v1566
  %v1681 = vsel %vm622, %v1665, %v1568
  %v1682 = vsel %vm622, %v1666, %v1570
  %v1683 = vsel %vm639, %v1667, %v1604
  %v1684 = vsel %vm639, %v1668, %v1606
  %v1685 = vsel %vm639, %v1669, %v1608
  %v1686 = vsel %vm639, %v1670, %v1610
  %v1687 = vsel %vm639, %v1671, %v1612
  %v1688 = vsel %vm639, %v1672, %v1614
  %v1689 = vsel %vm639, %v1673, %v1616
  %v1690 = vsel %vm639, %v1674, %v1618
  %v1691 = vsel %vm639, %v1675, %v1620
  %v1692 = vsel %vm639, %v1676, %v1622
  %v1693 = vsel %vm639, %v1677, %v1624
  %v1694 = vsel %vm639, %v1678, %v1626
  %v1695 = vsel %vm639, %v1679, %v1628
  %v1696 = vsel %vm639, %v1680, %v1630
  %v1697 = vsel %vm639, %v1681, %v1632
  %v1698 = vsel %vm639, %v1682, %v1634
  %s1699 = scalar_lea.vmem %s3, 64
  %v1700 = vld [vmem:[%s1699] sm:$0xff]
  %v1701 = vld [vmem:[%s1699 + $0x8] sm:$0xff]
  %v1702 = vld [vmem:[%s1699 + $0x10] sm:$0xff]
  %v1703 = vld [vmem:[%s1699 + $0x18] sm:$0xff]
  %v1705 = vsel %vm666, %v1683, 0
  %v1708 = vsel %vm666, %v1684, 0
  %v1711 = vsel %vm666, %v1685, 0
  %v1714 = vsel %vm666, %v1686, 0
  %v1717 = vsel %vm666, %v1687, 0
  %v1720 = vsel %vm666, %v1688, 0
  %v1723 = vsel %vm666, %v1689, 0
  %v1726 = vsel %vm666, %v1690, 0
  %v1729 = vsel %vm666, %v1691, 0
  %v1732 = vsel %vm666, %v1692, 0
  %v1735 = vsel %vm666, %v1693, 0
  %v1738 = vsel %vm666, %v1694, 0
  %v1741 = vsel %vm666, %v1695, 0
  %v1744 = vsel %vm666, %v1696, 0
  %v1747 = vsel %vm666, %v1697, 0
  %v1750 = vsel %vm666, %v1698, 0
  %1752 = vmatprep.subr.mxu0 0.0
  %1753 = vmatpush1.msra.mxu0 %v1700
  %1754 = vmatprep.subr.mxu0 0.0
  %1755 = vmatpush1.msra.mxu0 %v1701
  %1756 = vmatprep.subr.mxu0 0.0
  %1757 = vmatpush1.msra.mxu0 %v1702
  %1758 = vmatprep.subr.mxu0 0.0
  %1759 = vmatpush1.msra.mxu0 %v1703
  %1760 = vmatprep.subr.mxu0 0.0
  %1761 = vmatpush1.msra.mxu0 0.0
  %1762 = vmatprep.subr.mxu0 0.0
  %1763 = vmatpush1.msra.mxu0 0.0
  %1764 = vmatprep.subr.mxu0 0.0
  %1765 = vmatpush1.msra.mxu0 0.0
  %1766 = vmatprep.subr.mxu0 0.0
  %1767 = vmatpush1.msra.mxu0 0.0
  %1768 = vmatprep.subr.mxu0 0.0
  %1769 = vmatpush1.msra.mxu0 0.0
  %1770 = vmatprep.subr.mxu0 0.0
  %1771 = vmatpush1.msra.mxu0 0.0
  %1772 = vmatprep.subr.mxu0 0.0
  %1773 = vmatpush1.msra.mxu0 0.0
  %1774 = vmatprep.subr.mxu0 0.0
  %1775 = vmatpush1.msra.mxu0 0.0
  %1776 = vmatprep.subr.mxu0 0.0
  %1777 = vmatpush1.msra.mxu0 0.0
  %1778 = vmatprep.subr.mxu0 0.0
  %1779 = vmatpush1.msra.mxu0 0.0
  %1780 = vmatprep.subr.mxu0 0.0
  %1781 = vmatpush1.msra.mxu0 0.0
  %1782 = vmatprep.subr.mxu0 0.0
  %1783 = vmatpush1.msra.mxu0 0.0
  %1784 = vmatprep.subr.mxu0 0.0
  %1785 = vmatpush1.msra.mxu0 0.0
  %1786 = vmatprep.subr.mxu0 0.0
  %1787 = vmatpush1.msra.mxu0 0.0
  %1788 = vmatprep.subr.mxu0 0.0
  %1789 = vmatpush1.msra.mxu0 0.0
  %1790 = vmatprep.subr.mxu0 0.0
  %1791 = vmatpush1.msra.mxu0 0.0
  %1792 = vmatprep.subr.mxu0 0.0
  %1793 = vmatpush1.msra.mxu0 0.0
  %1794 = vmatprep.subr.mxu0 0.0
  %1795 = vmatpush1.msra.mxu0 0.0
  %1796 = vmatprep.subr.mxu0 0.0
  %1797 = vmatpush1.msra.mxu0 0.0
  %1798 = vmatprep.subr.mxu0 0.0
  %1799 = vmatpush1.msra.mxu0 0.0
  %1800 = vmatprep.subr.mxu0 0.0
  %1801 = vmatpush1.msra.mxu0 0.0
  %1802 = vmatprep.subr.mxu0 0.0
  %1803 = vmatpush1.msra.mxu0 0.0
  %1804 = vmatprep.subr.mxu0 0.0
  %1805 = vmatpush1.msra.mxu0 0.0
  %1806 = vmatprep.subr.mxu0 0.0
  %1807 = vmatpush1.msra.mxu0 0.0
  %1808 = vmatprep.subr.mxu0 0.0
  %1809 = vmatpush1.msra.mxu0 0.0
  %1810 = vmatprep.subr.mxu0 0.0
  %1811 = vmatpush1.msra.mxu0 0.0
  %1812 = vmatprep.subr.mxu0 0.0
  %1813 = vmatpush1.msra.mxu0 0.0
  %1814 = vmatprep.subr.mxu0 0.0
  %1815 = vmatpush1.msra.mxu0 0.0
  %1816 = vmatprep.mubr.f32.mxu0 0.0
  %1817 = vmatmul.mubr.f32.gmra.mrb[0].mxu0 %v1705
  %v1818 = vpop.f32.mrb[0].mxu0
  %v1819 = vadd.f32 %v664, %v1818
  %v1820 = vpop.f32.mrb[0].mxu0
  %1821 = vmatprep.mubr.f32.mxu0 0.0
  %1822 = vmatmul.mubr.f32.gmra.mrb[0].mxu0 %v1708
  %v1823 = vpop.f32.mrb[0].mxu0
  %v1824 = vadd.f32 %v664, %v1823
  %v1825 = vpop.f32.mrb[0].mxu0
  %1826 = vmatprep.mubr.f32.mxu0 0.0
  %1827 = vmatmul.mubr.f32.gmra.mrb[0].mxu0 %v1711
  %v1828 = vpop.f32.mrb[0].mxu0
  %v1829 = vadd.f32 %v664, %v1828
  %v1830 = vpop.f32.mrb[0].mxu0
  %1831 = vmatprep.mubr.f32.mxu0 0.0
  %1832 = vmatmul.mubr.f32.gmra.mrb[0].mxu0 %v1714
  %v1833 = vpop.f32.mrb[0].mxu0
  %v1834 = vadd.f32 %v664, %v1833
  %v1835 = vpop.f32.mrb[0].mxu0
  %1836 = vmatprep.mubr.f32.mxu0 0.0
  %1837 = vmatmul.mubr.f32.gmra.mrb[0].mxu0 %v1717
  %v1838 = vpop.f32.mrb[0].mxu0
  %v1839 = vadd.f32 %v664, %v1838
  %v1840 = vpop.f32.mrb[0].mxu0
  %1841 = vmatprep.mubr.f32.mxu0 0.0
  %1842 = vmatmul.mubr.f32.gmra.mrb[0].mxu0 %v1720
  %v1843 = vpop.f32.mrb[0].mxu0
  %v1844 = vadd.f32 %v664, %v1843
  %v1845 = vpop.f32.mrb[0].mxu0
  %1846 = vmatprep.mubr.f32.mxu0 0.0
  %1847 = vmatmul.mubr.f32.gmra.mrb[0].mxu0 %v1723
  %v1848 = vpop.f32.mrb[0].mxu0
  %v1849 = vadd.f32 %v664, %v1848
  %v1850 = vpop.f32.mrb[0].mxu0
  %1851 = vmatprep.mubr.f32.mxu0 0.0
  %1852 = vmatmul.mubr.f32.gmra.mrb[0].mxu0 %v1726
  %v1853 = vpop.f32.mrb[0].mxu0
  %v1854 = vadd.f32 %v664, %v1853
  %v1855 = vpop.f32.mrb[0].mxu0
  %1856 = vmatprep.mubr.f32.mxu0 0.0
  %1857 = vmatmul.mubr.f32.gmra.mrb[0].mxu0 %v1729
  %v1858 = vpop.f32.mrb[0].mxu0
  %v1859 = vadd.f32 %v664, %v1858
  %v1860 = vpop.f32.mrb[0].mxu0
  %1861 = vmatprep.mubr.f32.mxu0 0.0
  %1862 = vmatmul.mubr.f32.gmra.mrb[0].mxu0 %v1732
  %v1863 = vpop.f32.mrb[0].mxu0
  %v1864 = vadd.f32 %v664, %v1863
  %v1865 = vpop.f32.mrb[0].mxu0
  %1866 = vmatprep.mubr.f32.mxu0 0.0
  %1867 = vmatmul.mubr.f32.gmra.mrb[0].mxu0 %v1735
  %v1868 = vpop.f32.mrb[0].mxu0
  %v1869 = vadd.f32 %v664, %v1868
  %v1870 = vpop.f32.mrb[0].mxu0
  %1871 = vmatprep.mubr.f32.mxu0 0.0
  %1872 = vmatmul.mubr.f32.gmra.mrb[0].mxu0 %v1738
  %v1873 = vpop.f32.mrb[0].mxu0
  %v1874 = vadd.f32 %v664, %v1873
  %v1875 = vpop.f32.mrb[0].mxu0
  %1876 = vmatprep.mubr.f32.mxu0 0.0
  %1877 = vmatmul.mubr.f32.gmra.mrb[0].mxu0 %v1741
  %v1878 = vpop.f32.mrb[0].mxu0
  %v1879 = vadd.f32 %v664, %v1878
  %v1880 = vpop.f32.mrb[0].mxu0
  %1881 = vmatprep.mubr.f32.mxu0 0.0
  %1882 = vmatmul.mubr.f32.gmra.mrb[0].mxu0 %v1744
  %v1883 = vpop.f32.mrb[0].mxu0
  %v1884 = vadd.f32 %v664, %v1883
  %v1885 = vpop.f32.mrb[0].mxu0
  %1886 = vmatprep.mubr.f32.mxu0 0.0
  %1887 = vmatmul.mubr.f32.gmra.mrb[0].mxu0 %v1747
  %v1888 = vpop.f32.mrb[0].mxu0
  %v1889 = vadd.f32 %v664, %v1888
  %v1890 = vpop.f32.mrb[0].mxu0
  %1891 = vmatprep.mubr.f32.mxu0 0.0
  %1892 = vmatmul.mubr.f32.gmra.mrb[0].mxu0 %v1750
  %v1893 = vpop.f32.mrb[0].mxu0
  %v1894 = vadd.f32 %v664, %v1893
  %v1895 = vpop.f32.mrb[0].mxu0
  %1896 = vdwg.mxu0
  %s1897 = scalar_lea.vmem %s5, 256
  %1898 = vst.msk [vmem:[%s1897] sm:$0xff] %vm294, %v1819
  %1899 = vst.msk [vmem:[%s1897 + $0x8] sm:$0xff] %vm294, %v1824
  %1900 = vst.msk [vmem:[%s1897 + $0x10] sm:$0xff] %vm294, %v1829
  %1901 = vst.msk [vmem:[%s1897 + $0x18] sm:$0xff] %vm294, %v1834
  %1902 = vst.msk [vmem:[%s1897 + $0x20] sm:$0xff] %vm294, %v1839
  %1903 = vst.msk [vmem:[%s1897 + $0x28] sm:$0xff] %vm294, %v1844
  %1904 = vst.msk [vmem:[%s1897 + $0x30] sm:$0xff] %vm294, %v1849
  %1905 = vst.msk [vmem:[%s1897 + $0x38] sm:$0xff] %vm294, %v1854
  %1906 = vst.msk [vmem:[%s1897 + $0x40] sm:$0xff] %vm294, %v1859
  %1907 = vst.msk [vmem:[%s1897 + $0x48] sm:$0xff] %vm294, %v1864
  %1908 = vst.msk [vmem:[%s1897 + $0x50] sm:$0xff] %vm294, %v1869
  %1909 = vst.msk [vmem:[%s1897 + $0x58] sm:$0xff] %vm294, %v1874
  %1910 = vst.msk [vmem:[%s1897 + $0x60] sm:$0xff] %vm294, %v1879
  %1911 = vst.msk [vmem:[%s1897 + $0x68] sm:$0xff] %vm294, %v1884
  %1912 = vst.msk [vmem:[%s1897 + $0x70] sm:$0xff] %vm294, %v1889
  %1913 = vst.msk [vmem:[%s1897 + $0x78] sm:$0xff] %vm294, %v1894
  %v1914 = vld [vmem:[#allocation2] sm:$0xff]
  %v1915 = vld [vmem:[#allocation2 + $0x10] sm:$0xff]
  %v1916 = vld [vmem:[#allocation2 + $0x20] sm:$0xff]
  %v1917 = vld [vmem:[#allocation2 + $0x30] sm:$0xff]
  %v1918 = vld [vmem:[#allocation2 + $0x40] sm:$0xff]
  %v1919 = vld [vmem:[#allocation2 + $0x50] sm:$0xff]
  %v1920 = vld [vmem:[#allocation2 + $0x60] sm:$0xff]
  %v1921 = vld [vmem:[#allocation2 + $0x70] sm:$0xff]
  %v1922 = vld [vmem:[#allocation2 + $0x90] sm:$0xff]
  %v1923 = vld [vmem:[#allocation2 + $0xa0] sm:$0xff]
  %v1924 = vld [vmem:[#allocation2 + $0xb0] sm:$0xff]
  %v1925 = vld [vmem:[#allocation2 + $0xc0] sm:$0xff]
  %v1926 = vld [vmem:[#allocation2 + $0xd0] sm:$0xff]
  %v1927 = vld [vmem:[#allocation2 + $0xe0] sm:$0xff]
  %v1928 = vld [vmem:[#allocation2 + $0xf0] sm:$0xff]
  %v1929 = vld [vmem:[#allocation2 + $0x100] sm:$0xff]
  %v1930 = vld [vmem:[#allocation2 + $0x1] sm:$0xff]
  %v1931 = vld [vmem:[#allocation2 + $0x11] sm:$0xff]
  %v1932 = vld [vmem:[#allocation2 + $0x21] sm:$0xff]
  %v1933 = vld [vmem:[#allocation2 + $0x31] sm:$0xff]
  %v1934 = vld [vmem:[#allocation2 + $0x41] sm:$0xff]
  %v1935 = vld [vmem:[#allocation2 + $0x51] sm:$0xff]
  %v1936 = vld [vmem:[#allocation2 + $0x61] sm:$0xff]
  %v1937 = vld [vmem:[#allocation2 + $0x71] sm:$0xff]
  %v1938 = vld [vmem:[#allocation2 + $0x91] sm:$0xff]
  %v1939 = vld [vmem:[#allocation2 + $0xa1] sm:$0xff]
  %v1940 = vld [vmem:[#allocation2 + $0xb1] sm:$0xff]
  %v1941 = vld [vmem:[#allocation2 + $0xc1] sm:$0xff]
  %v1942 = vld [vmem:[#allocation2 + $0xd1] sm:$0xff]
  %v1943 = vld [vmem:[#allocation2 + $0xe1] sm:$0xff]
  %v1944 = vld [vmem:[#allocation2 + $0xf1] sm:$0xff]
  %v1945 = vld [vmem:[#allocation2 + $0x101] sm:$0xff]
  %v1946 = vld [vmem:[%s381] sm:$0xff]
  %v1947 = vld [vmem:[%s381 + $0x10] sm:$0xff]
  %v1948 = vld [vmem:[%s381 + $0x20] sm:$0xff]
  %v1949 = vld [vmem:[%s381 + $0x30] sm:$0xff]
  %v1950 = vld [vmem:[%s381 + $0x40] sm:$0xff]
  %v1951 = vld [vmem:[%s381 + $0x50] sm:$0xff]
  %v1952 = vld [vmem:[%s381 + $0x60] sm:$0xff]
  %v1953 = vld [vmem:[%s381 + $0x70] sm:$0xff]
  %v1954 = vld [vmem:[%s381 + $0x90] sm:$0xff]
  %v1955 = vld [vmem:[%s381 + $0xa0] sm:$0xff]
  %v1956 = vld [vmem:[%s381 + $0xb0] sm:$0xff]
  %v1957 = vld [vmem:[%s381 + $0xc0] sm:$0xff]
  %v1958 = vld [vmem:[%s381 + $0xd0] sm:$0xff]
  %v1959 = vld [vmem:[%s381 + $0xe0] sm:$0xff]
  %v1960 = vld [vmem:[%s381 + $0xf0] sm:$0xff]
  %v1961 = vld [vmem:[%s381 + $0x100] sm:$0xff]
  %v1962 = vld [vmem:[%s381 + $0x1] sm:$0xff]
  %v1963 = vld [vmem:[%s381 + $0x11] sm:$0xff]
  %v1964 = vld [vmem:[%s381 + $0x21] sm:$0xff]
  %v1965 = vld [vmem:[%s381 + $0x31] sm:$0xff]
  %v1966 = vld [vmem:[%s381 + $0x41] sm:$0xff]
  %v1967 = vld [vmem:[%s381 + $0x51] sm:$0xff]
  %v1968 = vld [vmem:[%s381 + $0x61] sm:$0xff]
  %v1969 = vld [vmem:[%s381 + $0x71] sm:$0xff]
  %v1970 = vld [vmem:[%s381 + $0x91] sm:$0xff]
  %v1971 = vld [vmem:[%s381 + $0xa1] sm:$0xff]
  %v1972 = vld [vmem:[%s381 + $0xb1] sm:$0xff]
  %v1973 = vld [vmem:[%s381 + $0xc1] sm:$0xff]
  %v1974 = vld [vmem:[%s381 + $0xd1] sm:$0xff]
  %v1975 = vld [vmem:[%s381 + $0xe1] sm:$0xff]
  %v1976 = vld [vmem:[%s381 + $0xf1] sm:$0xff]
  %v1977 = vld [vmem:[%s381 + $0x101] sm:$0xff]
  %1994 = vrot.lane.b32.xlu0 %v1930, 8
  %v1995 = vpop.permute.xlu0 %1994
  %1996 = vrot.lane.b32.xlu0 %v1931, 8
  %v1997 = vpop.permute.xlu0 %1996
  %1998 = vrot.lane.b32.xlu0 %v1932, 8
  %v1999 = vpop.permute.xlu0 %1998
  %2000 = vrot.lane.b32.xlu0 %v1933, 8
  %v2001 = vpop.permute.xlu0 %2000
  %2002 = vrot.lane.b32.xlu0 %v1934, 8
  %v2003 = vpop.permute.xlu0 %2002
  %2004 = vrot.lane.b32.xlu0 %v1935, 8
  %v2005 = vpop.permute.xlu0 %2004
  %2006 = vrot.lane.b32.xlu0 %v1936, 8
  %v2007 = vpop.permute.xlu0 %2006
  %2008 = vrot.lane.b32.xlu0 %v1937, 8
  %v2009 = vpop.permute.xlu0 %2008
  %2010 = vrot.lane.b32.xlu0 %v1938, 8
  %v2011 = vpop.permute.xlu0 %2010
  %2012 = vrot.lane.b32.xlu0 %v1939, 8
  %v2013 = vpop.permute.xlu0 %2012
  %2014 = vrot.lane.b32.xlu0 %v1940, 8
  %v2015 = vpop.permute.xlu0 %2014
  %2016 = vrot.lane.b32.xlu0 %v1941, 8
  %v2017 = vpop.permute.xlu0 %2016
  %2018 = vrot.lane.b32.xlu0 %v1942, 8
  %v2019 = vpop.permute.xlu0 %2018
  %2020 = vrot.lane.b32.xlu0 %v1943, 8
  %v2021 = vpop.permute.xlu0 %2020
  %2022 = vrot.lane.b32.xlu0 %v1944, 8
  %v2023 = vpop.permute.xlu0 %2022
  %2024 = vrot.lane.b32.xlu0 %v1945, 8
  %v2025 = vpop.permute.xlu0 %2024
  %2058 = vrot.lane.b32.xlu0 %v1946, 16
  %v2059 = vpop.permute.xlu0 %2058
  %2060 = vrot.lane.b32.xlu0 %v1947, 16
  %v2061 = vpop.permute.xlu0 %2060
  %2062 = vrot.lane.b32.xlu0 %v1948, 16
  %v2063 = vpop.permute.xlu0 %2062
  %2064 = vrot.lane.b32.xlu0 %v1949, 16
  %v2065 = vpop.permute.xlu0 %2064
  %2066 = vrot.lane.b32.xlu0 %v1950, 16
  %v2067 = vpop.permute.xlu0 %2066
  %2068 = vrot.lane.b32.xlu0 %v1951, 16
  %v2069 = vpop.permute.xlu0 %2068
  %2070 = vrot.lane.b32.xlu0 %v1952, 16
  %v2071 = vpop.permute.xlu0 %2070
  %2072 = vrot.lane.b32.xlu0 %v1953, 16
  %v2073 = vpop.permute.xlu0 %2072
  %2074 = vrot.lane.b32.xlu0 %v1954, 16
  %v2075 = vpop.permute.xlu0 %2074
  %2076 = vrot.lane.b32.xlu0 %v1955, 16
  %v2077 = vpop.permute.xlu0 %2076
  %2078 = vrot.lane.b32.xlu0 %v1956, 16
  %v2079 = vpop.permute.xlu0 %2078
  %2080 = vrot.lane.b32.xlu0 %v1957, 16
  %v2081 = vpop.permute.xlu0 %2080
  %2082 = vrot.lane.b32.xlu0 %v1958, 16
  %v2083 = vpop.permute.xlu0 %2082
  %2084 = vrot.lane.b32.xlu0 %v1959, 16
  %v2085 = vpop.permute.xlu0 %2084
  %2086 = vrot.lane.b32.xlu0 %v1960, 16
  %v2087 = vpop.permute.xlu0 %2086
  %2088 = vrot.lane.b32.xlu0 %v1961, 16
  %v2089 = vpop.permute.xlu0 %2088
  %2122 = vrot.lane.b32.xlu0 %v1962, 24
  %v2123 = vpop.permute.xlu0 %2122
  %2124 = vrot.lane.b32.xlu0 %v1963, 24
  %v2125 = vpop.permute.xlu0 %2124
  %2126 = vrot.lane.b32.xlu0 %v1964, 24
  %v2127 = vpop.permute.xlu0 %2126
  %2128 = vrot.lane.b32.xlu0 %v1965, 24
  %v2129 = vpop.permute.xlu0 %2128
  %2130 = vrot.lane.b32.xlu0 %v1966, 24
  %v2131 = vpop.permute.xlu0 %2130
  %2132 = vrot.lane.b32.xlu0 %v1967, 24
  %v2133 = vpop.permute.xlu0 %2132
  %2134 = vrot.lane.b32.xlu0 %v1968, 24
  %v2135 = vpop.permute.xlu0 %2134
  %2136 = vrot.lane.b32.xlu0 %v1969, 24
  %v2137 = vpop.permute.xlu0 %2136
  %2138 = vrot.lane.b32.xlu0 %v1970, 24
  %v2139 = vpop.permute.xlu0 %2138
  %2140 = vrot.lane.b32.xlu0 %v1971, 24
  %v2141 = vpop.permute.xlu0 %2140
  %2142 = vrot.lane.b32.xlu0 %v1972, 24
  %v2143 = vpop.permute.xlu0 %2142
  %2144 = vrot.lane.b32.xlu0 %v1973, 24
  %v2145 = vpop.permute.xlu0 %2144
  %2146 = vrot.lane.b32.xlu0 %v1974, 24
  %v2147 = vpop.permute.xlu0 %2146
  %2148 = vrot.lane.b32.xlu0 %v1975, 24
  %v2149 = vpop.permute.xlu0 %2148
  %2150 = vrot.lane.b32.xlu0 %v1976, 24
  %v2151 = vpop.permute.xlu0 %2150
  %2152 = vrot.lane.b32.xlu0 %v1977, 24
  %v2153 = vpop.permute.xlu0 %2152
  %v2170 = vsel %vm294, %v1914, %v1995
  %v2171 = vsel %vm294, %v1915, %v1997
  %v2172 = vsel %vm294, %v1916, %v1999
  %v2173 = vsel %vm294, %v1917, %v2001
  %v2174 = vsel %vm294, %v1918, %v2003
  %v2175 = vsel %vm294, %v1919, %v2005
  %v2176 = vsel %vm294, %v1920, %v2007
  %v2177 = vsel %vm294, %v1921, %v2009
  %v2178 = vsel %vm294, %v1922, %v2011
  %v2179 = vsel %vm294, %v1923, %v2013
  %v2180 = vsel %vm294, %v1924, %v2015
  %v2181 = vsel %vm294, %v1925, %v2017
  %v2182 = vsel %vm294, %v1926, %v2019
  %v2183 = vsel %vm294, %v1927, %v2021
  %v2184 = vsel %vm294, %v1928, %v2023
  %v2185 = vsel %vm294, %v1929, %v2025
  %v2186 = vsel %vm622, %v2170, %v2059
  %v2187 = vsel %vm622, %v2171, %v2061
  %v2188 = vsel %vm622, %v2172, %v2063
  %v2189 = vsel %vm622, %v2173, %v2065
  %v2190 = vsel %vm622, %v2174, %v2067
  %v2191 = vsel %vm622, %v2175, %v2069
  %v2192 = vsel %vm622, %v2176, %v2071
  %v2193 = vsel %vm622, %v2177, %v2073
  %v2194 = vsel %vm622, %v2178, %v2075
  %v2195 = vsel %vm622, %v2179, %v2077
  %v2196 = vsel %vm622, %v2180, %v2079
  %v2197 = vsel %vm622, %v2181, %v2081
  %v2198 = vsel %vm622, %v2182, %v2083
  %v2199 = vsel %vm622, %v2183, %v2085
  %v2200 = vsel %vm622, %v2184, %v2087
  %v2201 = vsel %vm622, %v2185, %v2089
  %v2202 = vsel %vm639, %v2186, %v2123
  %v2203 = vsel %vm639, %v2187, %v2125
  %v2204 = vsel %vm639, %v2188, %v2127
  %v2205 = vsel %vm639, %v2189, %v2129
  %v2206 = vsel %vm639, %v2190, %v2131
  %v2207 = vsel %vm639, %v2191, %v2133
  %v2208 = vsel %vm639, %v2192, %v2135
  %v2209 = vsel %vm639, %v2193, %v2137
  %v2210 = vsel %vm639, %v2194, %v2139
  %v2211 = vsel %vm639, %v2195, %v2141
  %v2212 = vsel %vm639, %v2196, %v2143
  %v2213 = vsel %vm639, %v2197, %v2145
  %v2214 = vsel %vm639, %v2198, %v2147
  %v2215 = vsel %vm639, %v2199, %v2149
  %v2216 = vsel %vm639, %v2200, %v2151
  %v2217 = vsel %vm639, %v2201, %v2153
  %s2218 = scalar_lea.vmem %s3, 96
  %v2219 = vld [vmem:[%s2218] sm:$0xff]
  %v2220 = vld [vmem:[%s2218 + $0x8] sm:$0xff]
  %v2221 = vld [vmem:[%s2218 + $0x10] sm:$0xff]
  %v2222 = vld [vmem:[%s2218 + $0x18] sm:$0xff]
  %v2224 = vsel %vm666, %v2202, 0
  %v2227 = vsel %vm666, %v2203, 0
  %v2230 = vsel %vm666, %v2204, 0
  %v2233 = vsel %vm666, %v2205, 0
  %v2236 = vsel %vm666, %v2206, 0
  %v2239 = vsel %vm666, %v2207, 0
  %v2242 = vsel %vm666, %v2208, 0
  %v2245 = vsel %vm666, %v2209, 0
  %v2248 = vsel %vm666, %v2210, 0
  %v2251 = vsel %vm666, %v2211, 0
  %v2254 = vsel %vm666, %v2212, 0
  %v2257 = vsel %vm666, %v2213, 0
  %v2260 = vsel %vm666, %v2214, 0
  %v2263 = vsel %vm666, %v2215, 0
  %v2266 = vsel %vm666, %v2216, 0
  %v2269 = vsel %vm666, %v2217, 0
  %2271 = vmatprep.subr.mxu0 0.0
  %2272 = vmatpush1.msra.mxu0 %v2219
  %2273 = vmatprep.subr.mxu0 0.0
  %2274 = vmatpush1.msra.mxu0 %v2220
  %2275 = vmatprep.subr.mxu0 0.0
  %2276 = vmatpush1.msra.mxu0 %v2221
  %2277 = vmatprep.subr.mxu0 0.0
  %2278 = vmatpush1.msra.mxu0 %v2222
  %2279 = vmatprep.subr.mxu0 0.0
  %2280 = vmatpush1.msra.mxu0 0.0
  %2281 = vmatprep.subr.mxu0 0.0
  %2282 = vmatpush1.msra.mxu0 0.0
  %2283 = vmatprep.subr.mxu0 0.0
  %2284 = vmatpush1.msra.mxu0 0.0
  %2285 = vmatprep.subr.mxu0 0.0
  %2286 = vmatpush1.msra.mxu0 0.0
  %2287 = vmatprep.subr.mxu0 0.0
  %2288 = vmatpush1.msra.mxu0 0.0
  %2289 = vmatprep.subr.mxu0 0.0
  %2290 = vmatpush1.msra.mxu0 0.0
  %2291 = vmatprep.subr.mxu0 0.0
  %2292 = vmatpush1.msra.mxu0 0.0
  %2293 = vmatprep.subr.mxu0 0.0
  %2294 = vmatpush1.msra.mxu0 0.0
  %2295 = vmatprep.subr.mxu0 0.0
  %2296 = vmatpush1.msra.mxu0 0.0
  %2297 = vmatprep.subr.mxu0 0.0
  %2298 = vmatpush1.msra.mxu0 0.0
  %2299 = vmatprep.subr.mxu0 0.0
  %2300 = vmatpush1.msra.mxu0 0.0
  %2301 = vmatprep.subr.mxu0 0.0
  %2302 = vmatpush1.msra.mxu0 0.0
  %2303 = vmatprep.subr.mxu0 0.0
  %2304 = vmatpush1.msra.mxu0 0.0
  %2305 = vmatprep.subr.mxu0 0.0
  %2306 = vmatpush1.msra.mxu0 0.0
  %2307 = vmatprep.subr.mxu0 0.0
  %2308 = vmatpush1.msra.mxu0 0.0
  %2309 = vmatprep.subr.mxu0 0.0
  %2310 = vmatpush1.msra.mxu0 0.0
  %2311 = vmatprep.subr.mxu0 0.0
  %2312 = vmatpush1.msra.mxu0 0.0
  %2313 = vmatprep.subr.mxu0 0.0
  %2314 = vmatpush1.msra.mxu0 0.0
  %2315 = vmatprep.subr.mxu0 0.0
  %2316 = vmatpush1.msra.mxu0 0.0
  %2317 = vmatprep.subr.mxu0 0.0
  %2318 = vmatpush1.msra.mxu0 0.0
  %2319 = vmatprep.subr.mxu0 0.0
  %2320 = vmatpush1.msra.mxu0 0.0
  %2321 = vmatprep.subr.mxu0 0.0
  %2322 = vmatpush1.msra.mxu0 0.0
  %2323 = vmatprep.subr.mxu0 0.0
  %2324 = vmatpush1.msra.mxu0 0.0
  %2325 = vmatprep.subr.mxu0 0.0
  %2326 = vmatpush1.msra.mxu0 0.0
  %2327 = vmatprep.subr.mxu0 0.0
  %2328 = vmatpush1.msra.mxu0 0.0
  %2329 = vmatprep.subr.mxu0 0.0
  %2330 = vmatpush1.msra.mxu0 0.0
  %2331 = vmatprep.subr.mxu0 0.0
  %2332 = vmatpush1.msra.mxu0 0.0
  %2333 = vmatprep.subr.mxu0 0.0
  %2334 = vmatpush1.msra.mxu0 0.0
  %2335 = vmatprep.mubr.f32.mxu0 0.0
  %2336 = vmatmul.mubr.f32.gmra.mrb[0].mxu0 %v2224
  %v2337 = vpop.f32.mrb[0].mxu0
  %v2338 = vadd.f32 %v664, %v2337
  %v2339 = vpop.f32.mrb[0].mxu0
  %2340 = vmatprep.mubr.f32.mxu0 0.0
  %2341 = vmatmul.mubr.f32.gmra.mrb[0].mxu0 %v2227
  %v2342 = vpop.f32.mrb[0].mxu0
  %v2343 = vadd.f32 %v664, %v2342
  %v2344 = vpop.f32.mrb[0].mxu0
  %2345 = vmatprep.mubr.f32.mxu0 0.0
  %2346 = vmatmul.mubr.f32.gmra.mrb[0].mxu0 %v2230
  %v2347 = vpop.f32.mrb[0].mxu0
  %v2348 = vadd.f32 %v664, %v2347
  %v2349 = vpop.f32.mrb[0].mxu0
  %2350 = vmatprep.mubr.f32.mxu0 0.0
  %2351 = vmatmul.mubr.f32.gmra.mrb[0].mxu0 %v2233
  %v2352 = vpop.f32.mrb[0].mxu0
  %v2353 = vadd.f32 %v664, %v2352
  %v2354 = vpop.f32.mrb[0].mxu0
  %2355 = vmatprep.mubr.f32.mxu0 0.0
  %2356 = vmatmul.mubr.f32.gmra.mrb[0].mxu0 %v2236
  %v2357 = vpop.f32.mrb[0].mxu0
  %v2358 = vadd.f32 %v664, %v2357
  %v2359 = vpop.f32.mrb[0].mxu0
  %2360 = vmatprep.mubr.f32.mxu0 0.0
  %2361 = vmatmul.mubr.f32.gmra.mrb[0].mxu0 %v2239
  %v2362 = vpop.f32.mrb[0].mxu0
  %v2363 = vadd.f32 %v664, %v2362
  %v2364 = vpop.f32.mrb[0].mxu0
  %2365 = vmatprep.mubr.f32.mxu0 0.0
  %2366 = vmatmul.mubr.f32.gmra.mrb[0].mxu0 %v2242
  %v2367 = vpop.f32.mrb[0].mxu0
  %v2368 = vadd.f32 %v664, %v2367
  %v2369 = vpop.f32.mrb[0].mxu0
  %2370 = vmatprep.mubr.f32.mxu0 0.0
  %2371 = vmatmul.mubr.f32.gmra.mrb[0].mxu0 %v2245
  %v2372 = vpop.f32.mrb[0].mxu0
  %v2373 = vadd.f32 %v664, %v2372
  %v2374 = vpop.f32.mrb[0].mxu0
  %2375 = vmatprep.mubr.f32.mxu0 0.0
  %2376 = vmatmul.mubr.f32.gmra.mrb[0].mxu0 %v2248
  %v2377 = vpop.f32.mrb[0].mxu0
  %v2378 = vadd.f32 %v664, %v2377
  %v2379 = vpop.f32.mrb[0].mxu0
  %2380 = vmatprep.mubr.f32.mxu0 0.0
  %2381 = vmatmul.mubr.f32.gmra.mrb[0].mxu0 %v2251
  %v2382 = vpop.f32.mrb[0].mxu0
  %v2383 = vadd.f32 %v664, %v2382
  %v2384 = vpop.f32.mrb[0].mxu0
  %2385 = vmatprep.mubr.f32.mxu0 0.0
  %2386 = vmatmul.mubr.f32.gmra.mrb[0].mxu0 %v2254
  %v2387 = vpop.f32.mrb[0].mxu0
  %v2388 = vadd.f32 %v664, %v2387
  %v2389 = vpop.f32.mrb[0].mxu0
  %2390 = vmatprep.mubr.f32.mxu0 0.0
  %2391 = vmatmul.mubr.f32.gmra.mrb[0].mxu0 %v2257
  %v2392 = vpop.f32.mrb[0].mxu0
  %v2393 = vadd.f32 %v664, %v2392
  %v2394 = vpop.f32.mrb[0].mxu0
  %2395 = vmatprep.mubr.f32.mxu0 0.0
  %2396 = vmatmul.mubr.f32.gmra.mrb[0].mxu0 %v2260
  %v2397 = vpop.f32.mrb[0].mxu0
  %v2398 = vadd.f32 %v664, %v2397
  %v2399 = vpop.f32.mrb[0].mxu0
  %2400 = vmatprep.mubr.f32.mxu0 0.0
  %2401 = vmatmul.mubr.f32.gmra.mrb[0].mxu0 %v2263
  %v2402 = vpop.f32.mrb[0].mxu0
  %v2403 = vadd.f32 %v664, %v2402
  %v2404 = vpop.f32.mrb[0].mxu0
  %2405 = vmatprep.mubr.f32.mxu0 0.0
  %2406 = vmatmul.mubr.f32.gmra.mrb[0].mxu0 %v2266
  %v2407 = vpop.f32.mrb[0].mxu0
  %v2408 = vadd.f32 %v664, %v2407
  %v2409 = vpop.f32.mrb[0].mxu0
  %2410 = vmatprep.mubr.f32.mxu0 0.0
  %2411 = vmatmul.mubr.f32.gmra.mrb[0].mxu0 %v2269
  %v2412 = vpop.f32.mrb[0].mxu0
  %v2413 = vadd.f32 %v664, %v2412
  %v2414 = vpop.f32.mrb[0].mxu0
  %2415 = vdwg.mxu0
  %s2416 = scalar_lea.vmem %s5, 384
  %2417 = vst.msk [vmem:[%s2416] sm:$0xff] %vm294, %v2338
  %2418 = vst.msk [vmem:[%s2416 + $0x8] sm:$0xff] %vm294, %v2343
  %2419 = vst.msk [vmem:[%s2416 + $0x10] sm:$0xff] %vm294, %v2348
  %2420 = vst.msk [vmem:[%s2416 + $0x18] sm:$0xff] %vm294, %v2353
  %2421 = vst.msk [vmem:[%s2416 + $0x20] sm:$0xff] %vm294, %v2358
  %2422 = vst.msk [vmem:[%s2416 + $0x28] sm:$0xff] %vm294, %v2363
  %2423 = vst.msk [vmem:[%s2416 + $0x30] sm:$0xff] %vm294, %v2368
  %2424 = vst.msk [vmem:[%s2416 + $0x38] sm:$0xff] %vm294, %v2373
  %2425 = vst.msk [vmem:[%s2416 + $0x40] sm:$0xff] %vm294, %v2378
  %2426 = vst.msk [vmem:[%s2416 + $0x48] sm:$0xff] %vm294, %v2383
  %2427 = vst.msk [vmem:[%s2416 + $0x50] sm:$0xff] %vm294, %v2388
  %2428 = vst.msk [vmem:[%s2416 + $0x58] sm:$0xff] %vm294, %v2393
  %2429 = vst.msk [vmem:[%s2416 + $0x60] sm:$0xff] %vm294, %v2398
  %2430 = vst.msk [vmem:[%s2416 + $0x68] sm:$0xff] %vm294, %v2403
  %2431 = vst.msk [vmem:[%s2416 + $0x70] sm:$0xff] %vm294, %v2408
  %2432 = vst.msk [vmem:[%s2416 + $0x78] sm:$0xff] %vm294, %v2413
  // Predicated region
  $region22: #{double_deconv_forward.1} parent=0 // pred_check
    _
  $region23: #{double_deconv_forward.1} parent=0 // pred_check_branch
    %2434 = sbr.rel (0) target = $region25
  $region24: #{double_deconv_forward.1} parent=0 // pred_region
    _
  $region25: #{double_deconv_forward.1} parent=0 // pred_fallthru
    _
  // Predicated region
  $region26: #{double_deconv_forward.1} parent=0 // pred_check
    _
  $region27: #{double_deconv_forward.1} parent=0 // pred_check_branch
    %2436 = sbr.rel (0) target = $region29
  $region28: #{double_deconv_forward.1} parent=0 // pred_region
    _
  $region29: #{double_deconv_forward.1} parent=0 // pred_fallthru
    _

</llo_original>
